<compile_context>
chip_gen: v5e
topology: v5e:2x2
jax: 0.10.0
libtpu: 0.0.40
codegen_flags: <defaults>
</compile_context>

<pallas_src>
import functools

import jax
import jax.numpy as jnp
from jax import lax
from jax.experimental import pallas as pl
from jax.experimental.pallas import tpu as pltpu


# ----------------------------- Pallas kernel -----------------------------

def group_kernel(num_blocks, res_scale, dot_dtype,
                 x_ref,
                 w1_ref, b1_ref, w2_ref, b2_ref,
                 cw1_ref, cb1_ref, cw2_ref, cb2_ref,
                 tw_ref, tb_ref,
                 pool_ref, bcast_ref, lmask_ref, rmask_ref,
                 o_ref):
    x = x_ref[0].astype(jnp.float32)              # (C, Lp) lane-dense slab
    Lp = x.shape[1]
    lmask = lmask_ref[...]                        # (1, Lp) {0,1}: left neighbour valid
    rmask = rmask_ref[...]                        # (1, Lp) {0,1}: right neighbour valid
    pool = pool_ref[...]                          # (Lp, S) segmented mean matrix (1/L)
    bcast = bcast_ref[...]                        # (S, Lp) segment broadcast matrix

    def conv3(v, w, b):
        """Conv1d(k=3, s=1, p=1), per folded sample, as a single MXU matmul.

        v: (C, Lp) f32. w: (C_out, 3*C) fused taps (dot_dtype). b: (C_out, 1) f32.
        Neighbour shifts come from the XLU; segment/pad boundaries are zeroed by
        the precomputed lane masks (equivalent to the zero padding of Conv1d).
        """
        v_left = pltpu.roll(v, 1, 1) * lmask           # v_left[:, j] = v[:, j-1]
        v_right = pltpu.roll(v, Lp - 1, 1) * rmask     # v_right[:, j] = v[:, j+1]
        stacked = jnp.concatenate([v_left, v, v_right], axis=0).astype(dot_dtype)
        y = jnp.dot(w.astype(dot_dtype), stacked, preferred_element_type=jnp.float32)
        return y + b

    def block_body(blk, res):
        # RCAB: conv3 -> relu -> conv3 -> channel attention -> scaled residual.
        h = conv3(res, w1_ref[blk], b1_ref[blk])
        h = jnp.maximum(h, 0.0)
        h = conv3(h, w2_ref[blk], b2_ref[blk])
        # Channel attention per folded sample: segmented global-avg-pool, two 1x1
        # convs with relu/sigmoid, gate broadcast back over the segment's lanes.
        pooled = jnp.dot(h, pool, preferred_element_type=jnp.float32)               # (C, S)
        z = jnp.dot(cw1_ref[blk], pooled, preferred_element_type=jnp.float32) + cb1_ref[blk]
        z = jnp.maximum(z, 0.0)
        s = jnp.dot(cw2_ref[blk], z, preferred_element_type=jnp.float32) + cb2_ref[blk]
        s = jax.nn.sigmoid(s)                                                        # (C, S)
        gate = jnp.dot(s, bcast, preferred_element_type=jnp.float32)                 # (C, Lp)
        return res + res_scale * (h * gate)

    res = lax.fori_loop(0, num_blocks, block_body, x, unroll=(num_blocks <= 4))
    res = conv3(res, tw_ref[...], tb_ref[...])    # tail conv
    o_ref[0] = (res + x).astype(o_ref.dtype)      # outer residual


# ----------------------------- wrapper -----------------------------

def _choose_samples_per_step(n, l, target_lanes=1024):
    s = max(1, min(n, max(1, target_lanes // max(l, 1))))
    while n % s:
        s -= 1
    return s


def group_forward(x, kparams, *, num_blocks, res_scale,
                  dot_dtype=jnp.float32, samples_per_step=None):
    N, C, L = x.shape
    w1, b1, w2, b2, cw1, cb1, cw2, cb2, tw, tb = kparams
    Cr = cw1.shape[1]

    S = samples_per_step or _choose_samples_per_step(N, L)     # samples folded per step
    G = N // S                                                  # grid steps (parallel)
    Lp = max(128, ((S * L + 127) // 128) * 128)                 # lane-dense width

    # Fold samples into the lane axis: (N, C, L) -> (G, C, S*L) -> pad -> (G, C, Lp).
    xf = x.reshape(G, S, C, L).transpose(0, 2, 1, 3).reshape(G, C, S * L)
    xf = jnp.pad(xf, ((0, 0), (0, 0), (0, Lp - S * L)))

    # Lane-position constants: conv boundary masks + segment pool/broadcast matrices.
    col = jnp.arange(Lp)
    valid = col < S * L
    pos = col % L
    seg = col // L
    lmask = (valid & (pos != 0)).astype(jnp.float32)[None, :]          # (1, Lp)
    rmask = (valid & (pos != L - 1)).astype(jnp.float32)[None, :]      # (1, Lp)
    in_seg = (seg[:, None] == jnp.arange(S)[None, :]) & valid[:, None]
    pool = in_seg.astype(jnp.float32) / L                              # (Lp, S)
    bcast = in_seg.astype(jnp.float32).T                               # (S, Lp)

    # MXU operands for the conv matmuls (bf16 on request); accumulation & all
    # elementwise math stay f32 (biases/residuals/CA gate added in f32).
    w1 = w1.astype(dot_dtype)
    w2 = w2.astype(dot_dtype)
    tw = tw.astype(dot_dtype)

    consts = (w1, b1, w2, b2, cw1, cb1, cw2, cb2, tw, tb, pool, bcast, lmask, rmask)

    def full_spec(arr):
        rank = arr.ndim
        return pl.BlockSpec(arr.shape, lambda g, _r=rank: (0,) * _r)

    in_specs = [pl.BlockSpec((1, C, Lp), lambda g: (g, 0, 0))]
    in_specs += [full_spec(a) for a in consts]

    conv_flops = 2 * C * (3 * C) * Lp
    ca_flops = 2 * C * Lp * S + 2 * Cr * C * S + 2 * C * Cr * S + 2 * C * S * Lp
    cost = pl.CostEstimate(
        flops=int(G * ((2 * num_blocks + 1) * conv_flops + num_blocks * ca_flops)),
        transcendentals=int(G * num_blocks * C * S),
        bytes_accessed=int(2 * xf.size * xf.dtype.itemsize
                           + sum(int(a.size) * a.dtype.itemsize for a in consts)),
    )

    out = pl.pallas_call(
        functools.partial(group_kernel, num_blocks, res_scale, dot_dtype),
        out_shape=jax.ShapeDtypeStruct((G, C, Lp), x.dtype),
        grid=(G,),
        in_specs=in_specs,
        out_specs=pl.BlockSpec((1, C, Lp), lambda g: (g, 0, 0)),
        compiler_params=pltpu.CompilerParams(dimension_semantics=("parallel",)),
        cost_estimate=cost,
    )(xf, *consts)

    # Unfold lanes back to (N, C, L) and drop the pad columns.
    out = out[:, :, : S * L].reshape(G, C, S, L).transpose(0, 2, 1, 3).reshape(N, C, L)
    return out


# ----------------------------- parameter setup -----------------------------

def init_params(key, num_channels, num_blocks, reduction):
    """Deterministic synthetic params in PyTorch shapes, plus fused kernel layout."""
    C = num_channels
    Cr = C // reduction
    keys = jax.random.split(key, num_blocks * 8 + 2)
    ki = iter(range(len(keys)))

    def rnd(shape):
        return 0.1 * jax.random.normal(keys[next(ki)], shape, dtype=jnp.float32)

    torch_blocks = []
    for _ in range(num_blocks):
        w1 = rnd((C, C, 3)); b1 = rnd((C,))
        w2 = rnd((C, C, 3)); b2 = rnd((C,))
        ca1w = rnd((Cr, C, 1)); ca1b = rnd((Cr,))
        ca2w = rnd((C, Cr, 1)); ca2b = rnd((C,))
        torch_blocks.append((w1, b1, w2, b2, ca1w, ca1b, ca2w, ca2b))
    tw = rnd((C, C, 3)); tb = rnd((C,))
    torch_params = {"blocks": torch_blocks, "tail": (tw, tb)}

    def fuse3(w):
        # torch (C_out, C_in, 3) -> (C_out, 3*C_in); column k*C_in + i holds w[o, i, k]
        return jnp.transpose(w, (0, 2, 1)).reshape(w.shape[0], 3 * w.shape[1])

    k_w1 = jnp.stack([fuse3(b[0]) for b in torch_blocks])          # (NB, C, 3C)
    k_b1 = jnp.stack([b[1][:, None] for b in torch_blocks])        # (NB, C, 1)
    k_w2 = jnp.stack([fuse3(b[2]) for b in torch_blocks])
    k_b2 = jnp.stack([b[3][:, None] for b in torch_blocks])
    k_cw1 = jnp.stack([b[4][:, :, 0] for b in torch_blocks])       # (NB, Cr, C)
    k_cb1 = jnp.stack([b[5][:, None] for b in torch_blocks])       # (NB, Cr, 1)
    k_cw2 = jnp.stack([b[6][:, :, 0] for b in torch_blocks])       # (NB, C, Cr)
    k_cb2 = jnp.stack([b[7][:, None] for b in torch_blocks])       # (NB, C, 1)
    k_tw = fuse3(tw)                                               # (C, 3C)
    k_tb = tb[:, None]                                             # (C, 1)
    kparams = (k_w1, k_b1, k_w2, k_b2, k_cw1, k_cb1, k_cw2, k_cb2, k_tw, k_tb)
    return torch_params, kparams


# ----------------------------- pure-JAX reference -----------------------------

def ref_group(x, torch_params, *, num_blocks, res_scale):
    def conv1d(x, w, b, pad):
        y = lax.conv_general_dilated(
            x, w, window_strides=(1,), padding=[(pad, pad)],
            dimension_numbers=("NCH", "OIH", "NCH"))
        return y + b[None, :, None]

    res = x
    for blk in range(num_blocks):
        w1, b1, w2, b2, ca1w, ca1b, ca2w, ca2b = torch_params["blocks"][blk]
        h = jax.nn.relu(conv1d(res, w1, b1, 1))
        h = conv1d(h, w2, b2, 1)
        pooled = jnp.mean(h, axis=2, keepdims=True)                # AdaptiveAvgPool1d(1)
        z = jax.nn.relu(conv1d(pooled, ca1w, ca1b, 0))
        s = jax.nn.sigmoid(conv1d(z, ca2w, ca2b, 0))
        h = h * s
        res = res + res_scale * h
    tw, tb = torch_params["tail"]
    res = conv1d(res, tw, tb, 1)
    return res + x


if __name__ == "__main__":
    # Small shapes consistent with the module: Conv1d input is (N, C, L).
    N, C, L = 2, 32, 16
    num_blocks, reduction, res_scale = 2, 16, 1.0

    key = jax.random.PRNGKey(0)
    kx, kp = jax.random.split(key)
    x = jax.random.normal(kx, (N, C, L), dtype=jnp.float32)

    torch_params, kparams = init_params(kp, C, num_blocks, reduction)
    expected = jax.block_until_ready(
        ref_group(x, torch_params, num_blocks=num_blocks, res_scale=res_scale))

    # f32 MXU operands: matches reference to f32 accumulation-order noise.
    out = jax.block_until_ready(
        group_forward(x, kparams, num_blocks=num_blocks, res_scale=res_scale,
                      dot_dtype=jnp.float32))
    assert out.shape == (N, C, L) and out.dtype == jnp.float32
    assert jnp.allclose(out, expected, atol=1e-4, rtol=1e-4), (
        float(jnp.max(jnp.abs(out - expected))))

    # bf16 MXU operands with f32 accumulation (per perf review): loose tolerance.
    out_bf16 = jax.block_until_ready(
        group_forward(x, kparams, num_blocks=num_blocks, res_scale=res_scale,
                      dot_dtype=jnp.bfloat16))
    rel = (jnp.linalg.norm((out_bf16 - expected).astype(jnp.float32))
           / jnp.linalg.norm(expected.astype(jnp.float32)))
    assert out_bf16.shape == (N, C, L)
    assert bool(rel < 5e-2), float(rel)

    print("KERNEL_OK")
</pallas_src>

<mosaic_0001>
module attributes {stable_mosaic.version = 11 : i64} {
  func.func @group_kernel(%arg0: i32, %arg1: memref<1x32x128xf32, #tpu.memory_space<vmem>>, %arg2: memref<2x32x96xf32, #tpu.memory_space<vmem>>, %arg3: memref<2x32x1xf32, #tpu.memory_space<vmem>>, %arg4: memref<2x32x96xf32, #tpu.memory_space<vmem>>, %arg5: memref<2x32x1xf32, #tpu.memory_space<vmem>>, %arg6: memref<2x2x32xf32, #tpu.memory_space<vmem>>, %arg7: memref<2x2x1xf32, #tpu.memory_space<vmem>>, %arg8: memref<2x32x2xf32, #tpu.memory_space<vmem>>, %arg9: memref<2x32x1xf32, #tpu.memory_space<vmem>>, %arg10: memref<32x96xf32, #tpu.memory_space<vmem>>, %arg11: memref<32x1xf32, #tpu.memory_space<vmem>>, %arg12: memref<128x2xf32, #tpu.memory_space<vmem>>, %arg13: memref<2x128xf32, #tpu.memory_space<vmem>>, %arg14: memref<1x128xf32, #tpu.memory_space<vmem>>, %arg15: memref<1x128xf32, #tpu.memory_space<vmem>>, %arg16: memref<1x32x128xf32, #tpu.memory_space<vmem>>) attributes {dimension_semantics = [#tpu.dimension_semantics<parallel>], iteration_bounds = array<i64: 1>, scalar_prefetch = 0 : i64, scratch_operands = 0 : i64, tpu.core_type = #tpu.core_type<tc>, window_params = [{transform_indices = @transform_0, window_bounds = array<i64: 1, 32, 128>}, {pipeline_mode = #tpu.pipeline_mode<synchronous>, transform_indices = @transform_1, window_bounds = array<i64: 2, 32, 96>}, {pipeline_mode = #tpu.pipeline_mode<synchronous>, transform_indices = @transform_2, window_bounds = array<i64: 2, 32, 1>}, {pipeline_mode = #tpu.pipeline_mode<synchronous>, transform_indices = @transform_3, window_bounds = array<i64: 2, 32, 96>}, {pipeline_mode = #tpu.pipeline_mode<synchronous>, transform_indices = @transform_4, window_bounds = array<i64: 2, 32, 1>}, {pipeline_mode = #tpu.pipeline_mode<synchronous>, transform_indices = @transform_5, window_bounds = array<i64: 2, 2, 32>}, {pipeline_mode = #tpu.pipeline_mode<synchronous>, transform_indices = @transform_6, window_bounds = array<i64: 2, 2, 1>}, {pipeline_mode = #tpu.pipeline_mode<synchronous>, transform_indices = @transform_7, window_bounds = array<i64: 2, 32, 2>}, {pipeline_mode = #tpu.pipeline_mode<synchronous>, transform_indices = @transform_8, window_bounds = array<i64: 2, 32, 1>}, {pipeline_mode = #tpu.pipeline_mode<synchronous>, transform_indices = @transform_9, window_bounds = array<i64: 32, 96>}, {pipeline_mode = #tpu.pipeline_mode<synchronous>, transform_indices = @transform_10, window_bounds = array<i64: 32, 1>}, {pipeline_mode = #tpu.pipeline_mode<synchronous>, transform_indices = @transform_11, window_bounds = array<i64: 128, 2>}, {pipeline_mode = #tpu.pipeline_mode<synchronous>, transform_indices = @transform_12, window_bounds = array<i64: 2, 128>}, {pipeline_mode = #tpu.pipeline_mode<synchronous>, transform_indices = @transform_13, window_bounds = array<i64: 1, 128>}, {pipeline_mode = #tpu.pipeline_mode<synchronous>, transform_indices = @transform_14, window_bounds = array<i64: 1, 128>}, {transform_indices = @transform_15, window_bounds = array<i64: 1, 32, 128>}]} {
    %c0 = arith.constant 0 : index
    %c0_0 = arith.constant 0 : index
    %c0_1 = arith.constant 0 : index
    %0 = vector.load %arg1[%c0, %c0_0, %c0_1] : memref<1x32x128xf32, #tpu.memory_space<vmem>>, vector<1x32x128xf32>
    %1 = vector.shape_cast %0 : vector<1x32x128xf32> to vector<32x128xf32>
    %c0_2 = arith.constant 0 : index
    %c0_3 = arith.constant 0 : index
    %2 = vector.load %arg14[%c0_2, %c0_3] : memref<1x128xf32, #tpu.memory_space<vmem>>, vector<1x128xf32>
    %c0_4 = arith.constant 0 : index
    %c0_5 = arith.constant 0 : index
    %3 = vector.load %arg15[%c0_4, %c0_5] : memref<1x128xf32, #tpu.memory_space<vmem>>, vector<1x128xf32>
    %c0_6 = arith.constant 0 : index
    %c0_7 = arith.constant 0 : index
    %4 = vector.load %arg12[%c0_6, %c0_7] : memref<128x2xf32, #tpu.memory_space<vmem>>, vector<128x2xf32>
    %c0_8 = arith.constant 0 : index
    %c0_9 = arith.constant 0 : index
    %5 = vector.load %arg13[%c0_8, %c0_9] : memref<2x128xf32, #tpu.memory_space<vmem>>, vector<2x128xf32>
    %c0_i32 = arith.constant 0 : i32
    %6 = arith.index_cast %c0_i32 : i32 to index
    %c0_10 = arith.constant 0 : index
    %c0_11 = arith.constant 0 : index
    %7 = vector.load %arg2[%6, %c0_10, %c0_11] : memref<2x32x96xf32, #tpu.memory_space<vmem>>, vector<1x32x96xf32>
    %8 = vector.shape_cast %7 : vector<1x32x96xf32> to vector<32x96xf32>
    %9 = arith.index_cast %c0_i32 : i32 to index
    %c0_12 = arith.constant 0 : index
    %c0_13 = arith.constant 0 : index
    %10 = vector.load %arg3[%9, %c0_12, %c0_13] : memref<2x32x1xf32, #tpu.memory_space<vmem>>, vector<1x32x1xf32>
    %11 = vector.shape_cast %10 : vector<1x32x1xf32> to vector<32x1xf32>
    %c1_i32 = arith.constant 1 : i32
    %12 = tpu.dynamic_rotate %1 by %c1_i32 dim 1 : vector<32x128xf32>, i32 -> vector<32x128xf32>
    %13 = vector.broadcast %2 : vector<1x128xf32> to vector<32x128xf32>
    %14 = arith.mulf %12, %13 : vector<32x128xf32>
    %c127_i32 = arith.constant 127 : i32
    %15 = tpu.dynamic_rotate %1 by %c127_i32 dim 1 : vector<32x128xf32>, i32 -> vector<32x128xf32>
    %16 = vector.broadcast %3 : vector<1x128xf32> to vector<32x128xf32>
    %17 = arith.mulf %15, %16 : vector<32x128xf32>
    %18 = tpu.concatenate %14, %1, %17 in 0 : vector<32x128xf32>, vector<32x128xf32>, vector<32x128xf32> -> vector<96x128xf32>
    %cst = arith.constant dense<0.000000e+00> : vector<32x128xf32>
    %19 = tpu.matmul %8, %18, %cst {dimension_numbers = #tpu.dot_dimension_numbers<[1], [0], [0], [1], [0, 0, 1, 1], [], []>} : vector<32x96xf32>, vector<96x128xf32>, vector<32x128xf32> -> vector<32x128xf32>
    %20 = vector.broadcast %11 : vector<32x1xf32> to vector<32x128xf32>
    %21 = arith.addf %19, %20 : vector<32x128xf32>
    %cst_14 = arith.constant 0.000000e+00 : f32
    %22 = vector.broadcast %cst_14 : f32 to vector<32x128xf32>
    %23 = arith.maximumf %21, %22 : vector<32x128xf32>
    %24 = arith.index_cast %c0_i32 : i32 to index
    %c0_15 = arith.constant 0 : index
    %c0_16 = arith.constant 0 : index
    %25 = vector.load %arg4[%24, %c0_15, %c0_16] : memref<2x32x96xf32, #tpu.memory_space<vmem>>, vector<1x32x96xf32>
    %26 = vector.shape_cast %25 : vector<1x32x96xf32> to vector<32x96xf32>
    %27 = arith.index_cast %c0_i32 : i32 to index
    %c0_17 = arith.constant 0 : index
    %c0_18 = arith.constant 0 : index
    %28 = vector.load %arg5[%27, %c0_17, %c0_18] : memref<2x32x1xf32, #tpu.memory_space<vmem>>, vector<1x32x1xf32>
    %29 = vector.shape_cast %28 : vector<1x32x1xf32> to vector<32x1xf32>
    %c1_i32_19 = arith.constant 1 : i32
    %30 = tpu.dynamic_rotate %23 by %c1_i32_19 dim 1 : vector<32x128xf32>, i32 -> vector<32x128xf32>
    %31 = vector.broadcast %2 : vector<1x128xf32> to vector<32x128xf32>
    %32 = arith.mulf %30, %31 : vector<32x128xf32>
    %c127_i32_20 = arith.constant 127 : i32
    %33 = tpu.dynamic_rotate %23 by %c127_i32_20 dim 1 : vector<32x128xf32>, i32 -> vector<32x128xf32>
    %34 = vector.broadcast %3 : vector<1x128xf32> to vector<32x128xf32>
    %35 = arith.mulf %33, %34 : vector<32x128xf32>
    %36 = tpu.concatenate %32, %23, %35 in 0 : vector<32x128xf32>, vector<32x128xf32>, vector<32x128xf32> -> vector<96x128xf32>
    %cst_21 = arith.constant dense<0.000000e+00> : vector<32x128xf32>
    %37 = tpu.matmul %26, %36, %cst_21 {dimension_numbers = #tpu.dot_dimension_numbers<[1], [0], [0], [1], [0, 0, 1, 1], [], []>} : vector<32x96xf32>, vector<96x128xf32>, vector<32x128xf32> -> vector<32x128xf32>
    %38 = vector.broadcast %29 : vector<32x1xf32> to vector<32x128xf32>
    %39 = arith.addf %37, %38 : vector<32x128xf32>
    %cst_22 = arith.constant dense<0.000000e+00> : vector<32x2xf32>
    %40 = tpu.matmul %39, %4, %cst_22 {dimension_numbers = #tpu.dot_dimension_numbers<[1], [0], [0], [1], [0, 0, 1, 1], [], []>} : vector<32x128xf32>, vector<128x2xf32>, vector<32x2xf32> -> vector<32x2xf32>
    %41 = arith.index_cast %c0_i32 : i32 to index
    %c0_23 = arith.constant 0 : index
    %c0_24 = arith.constant 0 : index
    %42 = vector.load %arg6[%41, %c0_23, %c0_24] : memref<2x2x32xf32, #tpu.memory_space<vmem>>, vector<1x2x32xf32>
    %43 = vector.shape_cast %42 : vector<1x2x32xf32> to vector<2x32xf32>
    %cst_25 = arith.constant dense<0.000000e+00> : vector<2x2xf32>
    %44 = tpu.matmul %43, %40, %cst_25 {dimension_numbers = #tpu.dot_dimension_numbers<[1], [0], [0], [1], [0, 0, 1, 1], [], []>} : vector<2x32xf32>, vector<32x2xf32>, vector<2x2xf32> -> vector<2x2xf32>
    %45 = arith.index_cast %c0_i32 : i32 to index
    %c0_26 = arith.constant 0 : index
    %c0_27 = arith.constant 0 : index
    %46 = vector.load %arg7[%45, %c0_26, %c0_27] : memref<2x2x1xf32, #tpu.memory_space<vmem>>, vector<1x2x1xf32>
    %47 = vector.shape_cast %46 : vector<1x2x1xf32> to vector<2x1xf32>
    %48 = vector.broadcast %47 : vector<2x1xf32> to vector<2x2xf32>
    %49 = arith.addf %44, %48 : vector<2x2xf32>
    %cst_28 = arith.constant 0.000000e+00 : f32
    %50 = vector.broadcast %cst_28 : f32 to vector<2x2xf32>
    %51 = arith.maximumf %49, %50 : vector<2x2xf32>
    %52 = arith.index_cast %c0_i32 : i32 to index
    %c0_29 = arith.constant 0 : index
    %c0_30 = arith.constant 0 : index
    %53 = vector.load %arg8[%52, %c0_29, %c0_30] : memref<2x32x2xf32, #tpu.memory_space<vmem>>, vector<1x32x2xf32>
    %54 = vector.shape_cast %53 : vector<1x32x2xf32> to vector<32x2xf32>
    %cst_31 = arith.constant dense<0.000000e+00> : vector<32x2xf32>
    %55 = tpu.matmul %54, %51, %cst_31 {dimension_numbers = #tpu.dot_dimension_numbers<[1], [0], [0], [1], [0, 0, 1, 1], [], []>} : vector<32x2xf32>, vector<2x2xf32>, vector<32x2xf32> -> vector<32x2xf32>
    %56 = arith.index_cast %c0_i32 : i32 to index
    %c0_32 = arith.constant 0 : index
    %c0_33 = arith.constant 0 : index
    %57 = vector.load %arg9[%56, %c0_32, %c0_33] : memref<2x32x1xf32, #tpu.memory_space<vmem>>, vector<1x32x1xf32>
    %58 = vector.shape_cast %57 : vector<1x32x1xf32> to vector<32x1xf32>
    %59 = vector.broadcast %58 : vector<32x1xf32> to vector<32x2xf32>
    %60 = arith.addf %55, %59 : vector<32x2xf32>
    %61 = arith.negf %60 : vector<32x2xf32>
    %62 = math.exp %61 : vector<32x2xf32>
    %cst_34 = arith.constant 1.000000e+00 : f32
    %63 = vector.broadcast %cst_34 : f32 to vector<32x2xf32>
    %64 = arith.addf %63, %62 : vector<32x2xf32>
    %65 = arith.divf %63, %64 : vector<32x2xf32>
    %cst_35 = arith.constant dense<0.000000e+00> : vector<32x128xf32>
    %66 = tpu.matmul %65, %5, %cst_35 {dimension_numbers = #tpu.dot_dimension_numbers<[1], [0], [0], [1], [0, 0, 1, 1], [], []>} : vector<32x2xf32>, vector<2x128xf32>, vector<32x128xf32> -> vector<32x128xf32>
    %67 = arith.mulf %39, %66 : vector<32x128xf32>
    %cst_36 = arith.constant 1.000000e+00 : f32
    %68 = vector.broadcast %cst_36 : f32 to vector<32x128xf32>
    %69 = arith.mulf %68, %67 : vector<32x128xf32>
    %70 = arith.addf %1, %69 : vector<32x128xf32>
    %c1_i32_37 = arith.constant 1 : i32
    %71 = arith.index_cast %c1_i32_37 : i32 to index
    %c0_38 = arith.constant 0 : index
    %c0_39 = arith.constant 0 : index
    %72 = vector.load %arg2[%71, %c0_38, %c0_39] : memref<2x32x96xf32, #tpu.memory_space<vmem>>, vector<1x32x96xf32>
    %73 = vector.shape_cast %72 : vector<1x32x96xf32> to vector<32x96xf32>
    %74 = arith.index_cast %c1_i32_37 : i32 to index
    %c0_40 = arith.constant 0 : index
    %c0_41 = arith.constant 0 : index
    %75 = vector.load %arg3[%74, %c0_40, %c0_41] : memref<2x32x1xf32, #tpu.memory_space<vmem>>, vector<1x32x1xf32>
    %76 = vector.shape_cast %75 : vector<1x32x1xf32> to vector<32x1xf32>
    %c1_i32_42 = arith.constant 1 : i32
    %77 = tpu.dynamic_rotate %70 by %c1_i32_42 dim 1 : vector<32x128xf32>, i32 -> vector<32x128xf32>
    %78 = vector.broadcast %2 : vector<1x128xf32> to vector<32x128xf32>
    %79 = arith.mulf %77, %78 : vector<32x128xf32>
    %c127_i32_43 = arith.constant 127 : i32
    %80 = tpu.dynamic_rotate %70 by %c127_i32_43 dim 1 : vector<32x128xf32>, i32 -> vector<32x128xf32>
    %81 = vector.broadcast %3 : vector<1x128xf32> to vector<32x128xf32>
    %82 = arith.mulf %80, %81 : vector<32x128xf32>
    %83 = tpu.concatenate %79, %70, %82 in 0 : vector<32x128xf32>, vector<32x128xf32>, vector<32x128xf32> -> vector<96x128xf32>
    %cst_44 = arith.constant dense<0.000000e+00> : vector<32x128xf32>
    %84 = tpu.matmul %73, %83, %cst_44 {dimension_numbers = #tpu.dot_dimension_numbers<[1], [0], [0], [1], [0, 0, 1, 1], [], []>} : vector<32x96xf32>, vector<96x128xf32>, vector<32x128xf32> -> vector<32x128xf32>
    %85 = vector.broadcast %76 : vector<32x1xf32> to vector<32x128xf32>
    %86 = arith.addf %84, %85 : vector<32x128xf32>
    %cst_45 = arith.constant 0.000000e+00 : f32
    %87 = vector.broadcast %cst_45 : f32 to vector<32x128xf32>
    %88 = arith.maximumf %86, %87 : vector<32x128xf32>
    %89 = arith.index_cast %c1_i32_37 : i32 to index
    %c0_46 = arith.constant 0 : index
    %c0_47 = arith.constant 0 : index
    %90 = vector.load %arg4[%89, %c0_46, %c0_47] : memref<2x32x96xf32, #tpu.memory_space<vmem>>, vector<1x32x96xf32>
    %91 = vector.shape_cast %90 : vector<1x32x96xf32> to vector<32x96xf32>
    %92 = arith.index_cast %c1_i32_37 : i32 to index
    %c0_48 = arith.constant 0 : index
    %c0_49 = arith.constant 0 : index
    %93 = vector.load %arg5[%92, %c0_48, %c0_49] : memref<2x32x1xf32, #tpu.memory_space<vmem>>, vector<1x32x1xf32>
    %94 = vector.shape_cast %93 : vector<1x32x1xf32> to vector<32x1xf32>
    %c1_i32_50 = arith.constant 1 : i32
    %95 = tpu.dynamic_rotate %88 by %c1_i32_50 dim 1 : vector<32x128xf32>, i32 -> vector<32x128xf32>
    %96 = vector.broadcast %2 : vector<1x128xf32> to vector<32x128xf32>
    %97 = arith.mulf %95, %96 : vector<32x128xf32>
    %c127_i32_51 = arith.constant 127 : i32
    %98 = tpu.dynamic_rotate %88 by %c127_i32_51 dim 1 : vector<32x128xf32>, i32 -> vector<32x128xf32>
    %99 = vector.broadcast %3 : vector<1x128xf32> to vector<32x128xf32>
    %100 = arith.mulf %98, %99 : vector<32x128xf32>
    %101 = tpu.concatenate %97, %88, %100 in 0 : vector<32x128xf32>, vector<32x128xf32>, vector<32x128xf32> -> vector<96x128xf32>
    %cst_52 = arith.constant dense<0.000000e+00> : vector<32x128xf32>
    %102 = tpu.matmul %91, %101, %cst_52 {dimension_numbers = #tpu.dot_dimension_numbers<[1], [0], [0], [1], [0, 0, 1, 1], [], []>} : vector<32x96xf32>, vector<96x128xf32>, vector<32x128xf32> -> vector<32x128xf32>
    %103 = vector.broadcast %94 : vector<32x1xf32> to vector<32x128xf32>
    %104 = arith.addf %102, %103 : vector<32x128xf32>
    %cst_53 = arith.constant dense<0.000000e+00> : vector<32x2xf32>
    %105 = tpu.matmul %104, %4, %cst_53 {dimension_numbers = #tpu.dot_dimension_numbers<[1], [0], [0], [1], [0, 0, 1, 1], [], []>} : vector<32x128xf32>, vector<128x2xf32>, vector<32x2xf32> -> vector<32x2xf32>
    %106 = arith.index_cast %c1_i32_37 : i32 to index
    %c0_54 = arith.constant 0 : index
    %c0_55 = arith.constant 0 : index
    %107 = vector.load %arg6[%106, %c0_54, %c0_55] : memref<2x2x32xf32, #tpu.memory_space<vmem>>, vector<1x2x32xf32>
    %108 = vector.shape_cast %107 : vector<1x2x32xf32> to vector<2x32xf32>
    %cst_56 = arith.constant dense<0.000000e+00> : vector<2x2xf32>
    %109 = tpu.matmul %108, %105, %cst_56 {dimension_numbers = #tpu.dot_dimension_numbers<[1], [0], [0], [1], [0, 0, 1, 1], [], []>} : vector<2x32xf32>, vector<32x2xf32>, vector<2x2xf32> -> vector<2x2xf32>
    %110 = arith.index_cast %c1_i32_37 : i32 to index
    %c0_57 = arith.constant 0 : index
    %c0_58 = arith.constant 0 : index
    %111 = vector.load %arg7[%110, %c0_57, %c0_58] : memref<2x2x1xf32, #tpu.memory_space<vmem>>, vector<1x2x1xf32>
    %112 = vector.shape_cast %111 : vector<1x2x1xf32> to vector<2x1xf32>
    %113 = vector.broadcast %112 : vector<2x1xf32> to vector<2x2xf32>
    %114 = arith.addf %109, %113 : vector<2x2xf32>
    %cst_59 = arith.constant 0.000000e+00 : f32
    %115 = vector.broadcast %cst_59 : f32 to vector<2x2xf32>
    %116 = arith.maximumf %114, %115 : vector<2x2xf32>
    %117 = arith.index_cast %c1_i32_37 : i32 to index
    %c0_60 = arith.constant 0 : index
    %c0_61 = arith.constant 0 : index
    %118 = vector.load %arg8[%117, %c0_60, %c0_61] : memref<2x32x2xf32, #tpu.memory_space<vmem>>, vector<1x32x2xf32>
    %119 = vector.shape_cast %118 : vector<1x32x2xf32> to vector<32x2xf32>
    %cst_62 = arith.constant dense<0.000000e+00> : vector<32x2xf32>
    %120 = tpu.matmul %119, %116, %cst_62 {dimension_numbers = #tpu.dot_dimension_numbers<[1], [0], [0], [1], [0, 0, 1, 1], [], []>} : vector<32x2xf32>, vector<2x2xf32>, vector<32x2xf32> -> vector<32x2xf32>
    %121 = arith.index_cast %c1_i32_37 : i32 to index
    %c0_63 = arith.constant 0 : index
    %c0_64 = arith.constant 0 : index
    %122 = vector.load %arg9[%121, %c0_63, %c0_64] : memref<2x32x1xf32, #tpu.memory_space<vmem>>, vector<1x32x1xf32>
    %123 = vector.shape_cast %122 : vector<1x32x1xf32> to vector<32x1xf32>
    %124 = vector.broadcast %123 : vector<32x1xf32> to vector<32x2xf32>
    %125 = arith.addf %120, %124 : vector<32x2xf32>
    %126 = arith.negf %125 : vector<32x2xf32>
    %127 = math.exp %126 : vector<32x2xf32>
    %cst_65 = arith.constant 1.000000e+00 : f32
    %128 = vector.broadcast %cst_65 : f32 to vector<32x2xf32>
    %129 = arith.addf %128, %127 : vector<32x2xf32>
    %130 = arith.divf %128, %129 : vector<32x2xf32>
    %cst_66 = arith.constant dense<0.000000e+00> : vector<32x128xf32>
    %131 = tpu.matmul %130, %5, %cst_66 {dimension_numbers = #tpu.dot_dimension_numbers<[1], [0], [0], [1], [0, 0, 1, 1], [], []>} : vector<32x2xf32>, vector<2x128xf32>, vector<32x128xf32> -> vector<32x128xf32>
    %132 = arith.mulf %104, %131 : vector<32x128xf32>
    %cst_67 = arith.constant 1.000000e+00 : f32
    %133 = vector.broadcast %cst_67 : f32 to vector<32x128xf32>
    %134 = arith.mulf %133, %132 : vector<32x128xf32>
    %135 = arith.addf %70, %134 : vector<32x128xf32>
    %c2_i32 = arith.constant 2 : i32
    %c0_68 = arith.constant 0 : index
    %c0_69 = arith.constant 0 : index
    %136 = vector.load %arg10[%c0_68, %c0_69] : memref<32x96xf32, #tpu.memory_space<vmem>>, vector<32x96xf32>
    %c0_70 = arith.constant 0 : index
    %c0_71 = arith.constant 0 : index
    %137 = vector.load %arg11[%c0_70, %c0_71] : memref<32x1xf32, #tpu.memory_space<vmem>>, vector<32x1xf32>
    %c1_i32_72 = arith.constant 1 : i32
    %138 = tpu.dynamic_rotate %135 by %c1_i32_72 dim 1 : vector<32x128xf32>, i32 -> vector<32x128xf32>
    %139 = vector.broadcast %2 : vector<1x128xf32> to vector<32x128xf32>
    %140 = arith.mulf %138, %139 : vector<32x128xf32>
    %c127_i32_73 = arith.constant 127 : i32
    %141 = tpu.dynamic_rotate %135 by %c127_i32_73 dim 1 : vector<32x128xf32>, i32 -> vector<32x128xf32>
    %142 = vector.broadcast %3 : vector<1x128xf32> to vector<32x128xf32>
    %143 = arith.mulf %141, %142 : vector<32x128xf32>
    %144 = tpu.concatenate %140, %135, %143 in 0 : vector<32x128xf32>, vector<32x128xf32>, vector<32x128xf32> -> vector<96x128xf32>
    %cst_74 = arith.constant dense<0.000000e+00> : vector<32x128xf32>
    %145 = tpu.matmul %136, %144, %cst_74 {dimension_numbers = #tpu.dot_dimension_numbers<[1], [0], [0], [1], [0, 0, 1, 1], [], []>} : vector<32x96xf32>, vector<96x128xf32>, vector<32x128xf32> -> vector<32x128xf32>
    %146 = vector.broadcast %137 : vector<32x1xf32> to vector<32x128xf32>
    %147 = arith.addf %145, %146 : vector<32x128xf32>
    %148 = arith.addf %147, %1 : vector<32x128xf32>
    %c0_75 = arith.constant 0 : index
    %c0_76 = arith.constant 0 : index
    %c0_77 = arith.constant 0 : index
    %149 = vector.load %arg16[%c0_75, %c0_76, %c0_77] : memref<1x32x128xf32, #tpu.memory_space<vmem>>, vector<1x32x128xf32>
    %150 = vector.shape_cast %149 : vector<1x32x128xf32> to vector<32x128xf32>
    %151 = vector.shape_cast %148 : vector<32x128xf32> to vector<1x32x128xf32>
    tpu.vector_store %arg16[%c0_75, %c0_76, %c0_77], %151 {strides = array<i32>} : memref<1x32x128xf32, #tpu.memory_space<vmem>>, vector<1x32x128xf32>,
    return
  }
  func.func @transform_0(%arg0: i32) -> (i32, i32, i32) {
    %c0_i32 = arith.constant 0 : i32
    %c0_i32_0 = arith.constant 0 : i32
    %c0_i32_1 = arith.constant 0 : i32
    return %arg0, %c0_i32, %c0_i32_0 : i32, i32, i32
  }
  func.func @transform_1(%arg0: i32) -> (i32, i32, i32) {
    %c0_i32 = arith.constant 0 : i32
    %c0_i32_0 = arith.constant 0 : i32
    %c0_i32_1 = arith.constant 0 : i32
    %c0_i32_2 = arith.constant 0 : i32
    return %c0_i32, %c0_i32_0, %c0_i32_1 : i32, i32, i32
  }
  func.func @transform_2(%arg0: i32) -> (i32, i32, i32) {
    %c0_i32 = arith.constant 0 : i32
    %c0_i32_0 = arith.constant 0 : i32
    %c0_i32_1 = arith.constant 0 : i32
    %c0_i32_2 = arith.constant 0 : i32
    return %c0_i32, %c0_i32_0, %c0_i32_1 : i32, i32, i32
  }
  func.func @transform_3(%arg0: i32) -> (i32, i32, i32) {
    %c0_i32 = arith.constant 0 : i32
    %c0_i32_0 = arith.constant 0 : i32
    %c0_i32_1 = arith.constant 0 : i32
    %c0_i32_2 = arith.constant 0 : i32
    return %c0_i32, %c0_i32_0, %c0_i32_1 : i32, i32, i32
  }
  func.func @transform_4(%arg0: i32) -> (i32, i32, i32) {
    %c0_i32 = arith.constant 0 : i32
    %c0_i32_0 = arith.constant 0 : i32
    %c0_i32_1 = arith.constant 0 : i32
    %c0_i32_2 = arith.constant 0 : i32
    return %c0_i32, %c0_i32_0, %c0_i32_1 : i32, i32, i32
  }
  func.func @transform_5(%arg0: i32) -> (i32, i32, i32) {
    %c0_i32 = arith.constant 0 : i32
    %c0_i32_0 = arith.constant 0 : i32
    %c0_i32_1 = arith.constant 0 : i32
    %c0_i32_2 = arith.constant 0 : i32
    return %c0_i32, %c0_i32_0, %c0_i32_1 : i32, i32, i32
  }
  func.func @transform_6(%arg0: i32) -> (i32, i32, i32) {
    %c0_i32 = arith.constant 0 : i32
    %c0_i32_0 = arith.constant 0 : i32
    %c0_i32_1 = arith.constant 0 : i32
    %c0_i32_2 = arith.constant 0 : i32
    return %c0_i32, %c0_i32_0, %c0_i32_1 : i32, i32, i32
  }
  func.func @transform_7(%arg0: i32) -> (i32, i32, i32) {
    %c0_i32 = arith.constant 0 : i32
    %c0_i32_0 = arith.constant 0 : i32
    %c0_i32_1 = arith.constant 0 : i32
    %c0_i32_2 = arith.constant 0 : i32
    return %c0_i32, %c0_i32_0, %c0_i32_1 : i32, i32, i32
  }
  func.func @transform_8(%arg0: i32) -> (i32, i32, i32) {
    %c0_i32 = arith.constant 0 : i32
    %c0_i32_0 = arith.constant 0 : i32
    %c0_i32_1 = arith.constant 0 : i32
    %c0_i32_2 = arith.constant 0 : i32
    return %c0_i32, %c0_i32_0, %c0_i32_1 : i32, i32, i32
  }
  func.func @transform_9(%arg0: i32) -> (i32, i32) {
    %c0_i32 = arith.constant 0 : i32
    %c0_i32_0 = arith.constant 0 : i32
    %c0_i32_1 = arith.constant 0 : i32
    return %c0_i32, %c0_i32_0 : i32, i32
  }
  func.func @transform_10(%arg0: i32) -> (i32, i32) {
    %c0_i32 = arith.constant 0 : i32
    %c0_i32_0 = arith.constant 0 : i32
    %c0_i32_1 = arith.constant 0 : i32
    return %c0_i32, %c0_i32_0 : i32, i32
  }
  func.func @transform_11(%arg0: i32) -> (i32, i32) {
    %c0_i32 = arith.constant 0 : i32
    %c0_i32_0 = arith.constant 0 : i32
    %c0_i32_1 = arith.constant 0 : i32
    return %c0_i32, %c0_i32_0 : i32, i32
  }
  func.func @transform_12(%arg0: i32) -> (i32, i32) {
    %c0_i32 = arith.constant 0 : i32
    %c0_i32_0 = arith.constant 0 : i32
    %c0_i32_1 = arith.constant 0 : i32
    return %c0_i32, %c0_i32_0 : i32, i32
  }
  func.func @transform_13(%arg0: i32) -> (i32, i32) {
    %c0_i32 = arith.constant 0 : i32
    %c0_i32_0 = arith.constant 0 : i32
    %c0_i32_1 = arith.constant 0 : i32
    return %c0_i32, %c0_i32_0 : i32, i32
  }
  func.func @transform_14(%arg0: i32) -> (i32, i32) {
    %c0_i32 = arith.constant 0 : i32
    %c0_i32_0 = arith.constant 0 : i32
    %c0_i32_1 = arith.constant 0 : i32
    return %c0_i32, %c0_i32_0 : i32, i32
  }
  func.func @transform_15(%arg0: i32) -> (i32, i32, i32) {
    %c0_i32 = arith.constant 0 : i32
    %c0_i32_0 = arith.constant 0 : i32
    %c0_i32_1 = arith.constant 0 : i32
    return %arg0, %c0_i32, %c0_i32_0 : i32, i32, i32
  }
}

</mosaic_0001>

<llo_original>
// kernel: tpu_custom_call.1
$region0: #{tpu_custom_call.1}
  #allocation0 [shape = 'u32[]', space=smem, size = 0x4, offset = 0x4, fixed_abs, tag = 'smem constant byte address 0x4 - core index']
  #allocation1 [shape = 'u32[72,128]{1,0:T(1,128)}', space=vmem, size = 0x9000, scoped, tag = 'internal scratch']
  %s0 = inlined_call_operand.vmem [shape: f32[1,32,128], index: 0, kind: input, shape index: {}]
  %s1 = inlined_call_operand.vmem [shape: f32[2,32,96], index: 1, kind: input, shape index: {}]
  %s2 = inlined_call_operand.vmem [shape: f32[2,32,1], index: 2, kind: input, shape index: {}]
  %s3 = inlined_call_operand.vmem [shape: f32[2,32,96], index: 3, kind: input, shape index: {}]
  %s4 = inlined_call_operand.vmem [shape: f32[2,32,1], index: 4, kind: input, shape index: {}]
  %s5 = inlined_call_operand.vmem [shape: f32[2,2,32], index: 5, kind: input, shape index: {}]
  %s6 = inlined_call_operand.vmem [shape: f32[2,2,1], index: 6, kind: input, shape index: {}]
  %s7 = inlined_call_operand.vmem [shape: f32[2,32,2], index: 7, kind: input, shape index: {}]
  %s8 = inlined_call_operand.vmem [shape: f32[2,32,1], index: 8, kind: input, shape index: {}]
  %s9 = inlined_call_operand.vmem [shape: f32[32,96], index: 9, kind: input, shape index: {}]
  %s10 = inlined_call_operand.vmem [shape: f32[32,1], index: 10, kind: input, shape index: {}]
  %s11 = inlined_call_operand.vmem [shape: f32[128,2], index: 11, kind: input, shape index: {}]
  %s12 = inlined_call_operand.vmem [shape: f32[2,128], index: 12, kind: input, shape index: {}]
  %s13 = inlined_call_operand.vmem [shape: f32[1,128], index: 13, kind: input, shape index: {}]
  %s14 = inlined_call_operand.vmem [shape: f32[1,128], index: 14, kind: input, shape index: {}]
  %s15 = inlined_call_operand.hbm [shape: f32[1,32,128], index: 15, kind: output, shape index: {}]
  %s16 = sld [smem:[#allocation0]]
  $region70: #{tpu_custom_call.1} parent=0
    _
  %s18 = ssub.s32 1, %s16
  %s19 = scalar_select 0, %s18, %s16
  $region1: #{tpu_custom_call.1} parent=0
    #allocation2 [shape = 'u8[16384]{0}', space=vmem, size = 0x4000, scoped, tag = 'output window, operand 0, single buffered']
    #allocation3 [shape = 's32[1]{0}', space=sflag, size = 0x4, scoped, tag = 'scoped memory for tpu_custom_call.1']
    %20 = vsyncpa [#allocation3], 0
    // Predicated region
    $region2: #{tpu_custom_call.1} parent=1 // pred_check
      _
    $region3: #{tpu_custom_call.1} parent=1 // pred_check_branch
      %22 = sbr.rel (0) target = $region5
    $region4: #{tpu_custom_call.1} parent=1 // pred_region
      _
    $region5: #{tpu_custom_call.1} parent=1 // pred_fallthru
      _
    // Predicated region
    $region6: #{tpu_custom_call.1} parent=1 // pred_check
      _
    $region7: #{tpu_custom_call.1} parent=1 // pred_check_branch
      %24 = sbr.rel (0) target = $region9
    $region8: #{tpu_custom_call.1} parent=1 // pred_region
      _
    $region9: #{tpu_custom_call.1} parent=1 // pred_fallthru
      _
    // Predicated region
    $region10: #{tpu_custom_call.1} parent=1 // pred_check
      _
    $region11: #{tpu_custom_call.1} parent=1 // pred_check_branch
      %26 = sbr.rel (0) target = $region13
    $region12: #{tpu_custom_call.1} parent=1 // pred_region
      _
    $region13: #{tpu_custom_call.1} parent=1 // pred_fallthru
      _
    // Predicated region
    $region14: #{tpu_custom_call.1} parent=1 // pred_check
      _
    $region15: #{tpu_custom_call.1} parent=1 // pred_check_branch
      %28 = sbr.rel (0) target = $region17
    $region16: #{tpu_custom_call.1} parent=1 // pred_region
      _
    $region17: #{tpu_custom_call.1} parent=1 // pred_fallthru
      _
    // Predicated region
    $region18: #{tpu_custom_call.1} parent=1 // pred_check
      _
    $region19: #{tpu_custom_call.1} parent=1 // pred_check_branch
      %30 = sbr.rel (0) target = $region21
    $region20: #{tpu_custom_call.1} parent=1 // pred_region
      _
    $region21: #{tpu_custom_call.1} parent=1 // pred_fallthru
      _
    // Predicated region
    $region22: #{tpu_custom_call.1} parent=1 // pred_check
      _
    $region23: #{tpu_custom_call.1} parent=1 // pred_check_branch
      %32 = sbr.rel (0) target = $region25
    $region24: #{tpu_custom_call.1} parent=1 // pred_region
      _
    $region25: #{tpu_custom_call.1} parent=1 // pred_fallthru
      _
    // Predicated region
    $region26: #{tpu_custom_call.1} parent=1 // pred_check
      _
    $region27: #{tpu_custom_call.1} parent=1 // pred_check_branch
      %34 = sbr.rel (0) target = $region29
    $region28: #{tpu_custom_call.1} parent=1 // pred_region
      _
    $region29: #{tpu_custom_call.1} parent=1 // pred_fallthru
      _
    // Predicated region
    $region30: #{tpu_custom_call.1} parent=1 // pred_check
      _
    $region31: #{tpu_custom_call.1} parent=1 // pred_check_branch
      %36 = sbr.rel (0) target = $region33
    $region32: #{tpu_custom_call.1} parent=1 // pred_region
      _
    $region33: #{tpu_custom_call.1} parent=1 // pred_fallthru
      _
    // Predicated region
    $region34: #{tpu_custom_call.1} parent=1 // pred_check
      _
    $region35: #{tpu_custom_call.1} parent=1 // pred_check_branch
      %38 = sbr.rel (0) target = $region37
    $region36: #{tpu_custom_call.1} parent=1 // pred_region
      _
    $region37: #{tpu_custom_call.1} parent=1 // pred_fallthru
      _
    // Predicated region
    $region38: #{tpu_custom_call.1} parent=1 // pred_check
      _
    $region39: #{tpu_custom_call.1} parent=1 // pred_check_branch
      %40 = sbr.rel (0) target = $region41
    $region40: #{tpu_custom_call.1} parent=1 // pred_region
      _
    $region41: #{tpu_custom_call.1} parent=1 // pred_fallthru
      _
    // Predicated region
    $region42: #{tpu_custom_call.1} parent=1 // pred_check
      _
    $region43: #{tpu_custom_call.1} parent=1 // pred_check_branch
      %42 = sbr.rel (0) target = $region45
    $region44: #{tpu_custom_call.1} parent=1 // pred_region
      _
    $region45: #{tpu_custom_call.1} parent=1 // pred_fallthru
      _
    // Predicated region
    $region46: #{tpu_custom_call.1} parent=1 // pred_check
      _
    $region47: #{tpu_custom_call.1} parent=1 // pred_check_branch
      %44 = sbr.rel (0) target = $region49
    $region48: #{tpu_custom_call.1} parent=1 // pred_region
      _
    $region49: #{tpu_custom_call.1} parent=1 // pred_fallthru
      _
    // Predicated region
    $region50: #{tpu_custom_call.1} parent=1 // pred_check
      _
    $region51: #{tpu_custom_call.1} parent=1 // pred_check_branch
      %46 = sbr.rel (0) target = $region53
    $region52: #{tpu_custom_call.1} parent=1 // pred_region
      _
    $region53: #{tpu_custom_call.1} parent=1 // pred_fallthru
      _
    // Predicated region
    $region54: #{tpu_custom_call.1} parent=1 // pred_check
      _
    $region55: #{tpu_custom_call.1} parent=1 // pred_check_branch
      %48 = sbr.rel (0) target = $region57
    $region56: #{tpu_custom_call.1} parent=1 // pred_region
      _
    $region57: #{tpu_custom_call.1} parent=1 // pred_fallthru
      _
    // Predicated region
    $region58: #{tpu_custom_call.1} parent=1 // pred_check
      _
    $region59: #{tpu_custom_call.1} parent=1 // pred_check_branch
      %50 = sbr.rel (0) target = $region61
    $region60: #{tpu_custom_call.1} parent=1 // pred_region
      _
    $region61: #{tpu_custom_call.1} parent=1 // pred_fallthru
      _
    %v51 = vld [vmem:[%s0] sm:$0xff]
    %v52 = vld [vmem:[%s0 + $0x8] sm:$0xff]
    %v53 = vld [vmem:[%s0 + $0x10] sm:$0xff]
    %v54 = vld [vmem:[%s0 + $0x18] sm:$0xff]
    %v55 = vld [vmem:[%s13] sm:$0x1]
    %v56 = vld [vmem:[%s14] sm:$0x1]
    %v57 = vld [vmem:[%s11] sm:$0xff]
    %v58 = vld [vmem:[%s11 + $0x8] sm:$0xff]
    %v59 = vld [vmem:[%s11 + $0x10] sm:$0xff]
    %v60 = vld [vmem:[%s11 + $0x18] sm:$0xff]
    %v61 = vld [vmem:[%s11 + $0x20] sm:$0xff]
    %v62 = vld [vmem:[%s11 + $0x28] sm:$0xff]
    %v63 = vld [vmem:[%s11 + $0x30] sm:$0xff]
    %v64 = vld [vmem:[%s11 + $0x38] sm:$0xff]
    %v65 = vld [vmem:[%s11 + $0x40] sm:$0xff]
    %v66 = vld [vmem:[%s11 + $0x48] sm:$0xff]
    %v67 = vld [vmem:[%s11 + $0x50] sm:$0xff]
    %v68 = vld [vmem:[%s11 + $0x58] sm:$0xff]
    %v69 = vld [vmem:[%s11 + $0x60] sm:$0xff]
    %v70 = vld [vmem:[%s11 + $0x68] sm:$0xff]
    %v71 = vld [vmem:[%s11 + $0x70] sm:$0xff]
    %v72 = vld [vmem:[%s11 + $0x78] sm:$0xff]
    %v73 = vld [vmem:[%s12] sm:$0x3]
    %v74 = vld [vmem:[%s1] sm:$0xff]
    %v75 = vld [vmem:[%s1 + $0x8] sm:$0xff]
    %v76 = vld [vmem:[%s1 + $0x10] sm:$0xff]
    %v77 = vld [vmem:[%s1 + $0x18] sm:$0xff]
    %v78 = vld [vmem:[%s2] sm:$0xff]
    %v79 = vld [vmem:[%s2 + $0x8] sm:$0xff]
    %v80 = vld [vmem:[%s2 + $0x10] sm:$0xff]
    %v81 = vld [vmem:[%s2 + $0x18] sm:$0xff]
    %82 = vrot.lane.b32.xlu0 %v51, 1
    %v83 = vpop.permute.xlu0 %82
    %84 = vrot.lane.b32.xlu0 %v52, 1
    %v85 = vpop.permute.xlu0 %84
    %86 = vrot.lane.b32.xlu0 %v53, 1
    %v87 = vpop.permute.xlu0 %86
    %88 = vrot.lane.b32.xlu0 %v54, 1
    %v89 = vpop.permute.xlu0 %88
    %v91 = vperm.slane %v55, 0
    %v93 = vmul.f32 %v83, %v91
    %v94 = vmul.f32 %v85, %v91
    %v95 = vmul.f32 %v87, %v91
    %v96 = vmul.f32 %v89, %v91
    %97 = vrot.lane.b32.xlu0 %v51, 127
    %v98 = vpop.permute.xlu0 %97
    %99 = vrot.lane.b32.xlu0 %v52, 127
    %v100 = vpop.permute.xlu0 %99
    %101 = vrot.lane.b32.xlu0 %v53, 127
    %v102 = vpop.permute.xlu0 %101
    %103 = vrot.lane.b32.xlu0 %v54, 127
    %v104 = vpop.permute.xlu0 %103
    %v106 = vperm.slane %v56, 0
    %v108 = vmul.f32 %v98, %v106
    %v109 = vmul.f32 %v100, %v106
    %v110 = vmul.f32 %v102, %v106
    %v111 = vmul.f32 %v104, %v106
    %113 = vset.pattern.permute.xlu0 0
    %114 = vperm.xlu0 %113, %v78
    %v115 = vpop.permute.xlu0 %114
    %118 = vset.pattern.permute.xlu0 0
    %119 = vperm.xlu0 %118, %v79
    %v120 = vpop.permute.xlu0 %119
    %123 = vset.pattern.permute.xlu0 0
    %124 = vperm.xlu0 %123, %v80
    %v125 = vpop.permute.xlu0 %124
    %128 = vset.pattern.permute.xlu0 0
    %129 = vperm.xlu0 %128, %v81
    %v130 = vpop.permute.xlu0 %129
    %vm132 = vcmask 785408
    %v134 = vsel %vm132, %v74, 0
    %v137 = vsel %vm132, %v75, 0
    %v140 = vsel %vm132, %v76, 0
    %v143 = vsel %vm132, %v77, 0
    %145 = vmatpush.msra.mxu0 0.0
    %146 = vmatpush.msra.mxu0 0.0
    %147 = vmatpush.msra.mxu0 0.0
    %148 = vmatpush.msra.mxu0 0.0
    %149 = vmatpush.msra.mxu0 %v111
    %150 = vmatpush.msra.mxu0 %v110
    %151 = vmatpush.msra.mxu0 %v109
    %152 = vmatpush.msra.mxu0 %v108
    %153 = vmatpush.msra.mxu0 %v54
    %154 = vmatpush.msra.mxu0 %v53
    %155 = vmatpush.msra.mxu0 %v52
    %156 = vmatpush.msra.mxu0 %v51
    %157 = vmatpush.msra.mxu0 %v96
    %158 = vmatpush.msra.mxu0 %v95
    %159 = vmatpush.msra.mxu0 %v94
    %160 = vmatpush.msra.mxu0 %v93
    %161 = vmatmul.f32.gmra.mxu0 %v134
    %v162 = vpop.f32.mrf.mxu0
    %v163 = vadd.f32 %v115, %v162
    %164 = vmatmul.f32.gmra.mxu0 %v137
    %v165 = vpop.f32.mrf.mxu0
    %v166 = vadd.f32 %v120, %v165
    %167 = vmatmul.f32.gmra.mxu0 %v140
    %v168 = vpop.f32.mrf.mxu0
    %v169 = vadd.f32 %v125, %v168
    %170 = vmatmul.f32.gmra.mxu0 %v143
    %v171 = vpop.f32.mrf.mxu0
    %v172 = vadd.f32 %v130, %v171
    %173 = vdwg.mxu0
    %v174 = vmax.f32 %v163, 0.0
    %v175 = vmax.f32 %v166, 0.0
    %v176 = vmax.f32 %v169, 0.0
    %v177 = vmax.f32 %v172, 0.0
    %v178 = vld [vmem:[%s3] sm:$0xff]
    %v179 = vld [vmem:[%s3 + $0x8] sm:$0xff]
    %v180 = vld [vmem:[%s3 + $0x10] sm:$0xff]
    %v181 = vld [vmem:[%s3 + $0x18] sm:$0xff]
    %v182 = vld [vmem:[%s4] sm:$0xff]
    %v183 = vld [vmem:[%s4 + $0x8] sm:$0xff]
    %v184 = vld [vmem:[%s4 + $0x10] sm:$0xff]
    %v185 = vld [vmem:[%s4 + $0x18] sm:$0xff]
    %186 = vrot.lane.b32.xlu0 %v174, 1
    %v187 = vpop.permute.xlu0 %186
    %188 = vrot.lane.b32.xlu0 %v175, 1
    %v189 = vpop.permute.xlu0 %188
    %190 = vrot.lane.b32.xlu0 %v176, 1
    %v191 = vpop.permute.xlu0 %190
    %192 = vrot.lane.b32.xlu0 %v177, 1
    %v193 = vpop.permute.xlu0 %192
    %v194 = vmul.f32 %v187, %v91
    %v195 = vmul.f32 %v189, %v91
    %v196 = vmul.f32 %v191, %v91
    %v197 = vmul.f32 %v193, %v91
    %198 = vrot.lane.b32.xlu0 %v174, 127
    %v199 = vpop.permute.xlu0 %198
    %200 = vrot.lane.b32.xlu0 %v175, 127
    %v201 = vpop.permute.xlu0 %200
    %202 = vrot.lane.b32.xlu0 %v176, 127
    %v203 = vpop.permute.xlu0 %202
    %204 = vrot.lane.b32.xlu0 %v177, 127
    %v205 = vpop.permute.xlu0 %204
    %v206 = vmul.f32 %v199, %v106
    %v207 = vmul.f32 %v201, %v106
    %v208 = vmul.f32 %v203, %v106
    %v209 = vmul.f32 %v205, %v106
    %211 = vset.pattern.permute.xlu0 0
    %212 = vperm.xlu0 %211, %v182
    %v213 = vpop.permute.xlu0 %212
    %216 = vset.pattern.permute.xlu0 0
    %217 = vperm.xlu0 %216, %v183
    %v218 = vpop.permute.xlu0 %217
    %221 = vset.pattern.permute.xlu0 0
    %222 = vperm.xlu0 %221, %v184
    %v223 = vpop.permute.xlu0 %222
    %226 = vset.pattern.permute.xlu0 0
    %227 = vperm.xlu0 %226, %v185
    %v228 = vpop.permute.xlu0 %227
    %v231 = vsel %vm132, %v178, 0
    %v234 = vsel %vm132, %v179, 0
    %v237 = vsel %vm132, %v180, 0
    %v240 = vsel %vm132, %v181, 0
    %242 = vmatpush.msra.mxu0 0.0
    %243 = vmatpush.msra.mxu0 0.0
    %244 = vmatpush.msra.mxu0 0.0
    %245 = vmatpush.msra.mxu0 0.0
    %246 = vmatpush.msra.mxu0 %v209
    %247 = vmatpush.msra.mxu0 %v208
    %248 = vmatpush.msra.mxu0 %v207
    %249 = vmatpush.msra.mxu0 %v206
    %250 = vmatpush.msra.mxu0 %v177
    %251 = vmatpush.msra.mxu0 %v176
    %252 = vmatpush.msra.mxu0 %v175
    %253 = vmatpush.msra.mxu0 %v174
    %254 = vmatpush.msra.mxu0 %v197
    %255 = vmatpush.msra.mxu0 %v196
    %256 = vmatpush.msra.mxu0 %v195
    %257 = vmatpush.msra.mxu0 %v194
    %258 = vmatmul.f32.gmra.mxu0 %v231
    %v259 = vpop.f32.mrf.mxu0
    %v260 = vadd.f32 %v213, %v259
    %261 = vmatmul.f32.gmra.mxu0 %v234
    %v262 = vpop.f32.mrf.mxu0
    %v263 = vadd.f32 %v218, %v262
    %264 = vmatmul.f32.gmra.mxu0 %v237
    %v265 = vpop.f32.mrf.mxu0
    %v266 = vadd.f32 %v223, %v265
    %267 = vmatmul.f32.gmra.mxu0 %v240
    %v268 = vpop.f32.mrf.mxu0
    %v269 = vadd.f32 %v228, %v268
    %270 = vdwg.mxu0
    %271 = vmatpush.msra.mxu0 %v72
    %272 = vmatpush.msra.mxu0 %v71
    %273 = vmatpush.msra.mxu0 %v70
    %274 = vmatpush.msra.mxu0 %v69
    %275 = vmatpush.msra.mxu0 %v68
    %276 = vmatpush.msra.mxu0 %v67
    %277 = vmatpush.msra.mxu0 %v66
    %278 = vmatpush.msra.mxu0 %v65
    %279 = vmatpush.msra.mxu0 %v64
    %280 = vmatpush.msra.mxu0 %v63
    %281 = vmatpush.msra.mxu0 %v62
    %282 = vmatpush.msra.mxu0 %v61
    %283 = vmatpush.msra.mxu0 %v60
    %284 = vmatpush.msra.mxu0 %v59
    %285 = vmatpush.msra.mxu0 %v58
    %286 = vmatpush.msra.mxu0 %v57
    %287 = vmatmul.f32.gmra.mxu0 %v260
    %v288 = vpop.f32.mrf.mxu0
    %v289 = vadd.f32 0.0, %v288
    %290 = vmatmul.f32.gmra.mxu0 %v263
    %v291 = vpop.f32.mrf.mxu0
    %v292 = vadd.f32 0.0, %v291
    %293 = vmatmul.f32.gmra.mxu0 %v266
    %v294 = vpop.f32.mrf.mxu0
    %v295 = vadd.f32 0.0, %v294
    %296 = vmatmul.f32.gmra.mxu0 %v269
    %v297 = vpop.f32.mrf.mxu0
    %v298 = vadd.f32 0.0, %v297
    %299 = vdwg.mxu0
    %v300 = vld [vmem:[%s5] sm:$0x3]
    %v301 = vld [vmem:[%s6] sm:$0x3]
    %303 = vset.pattern.permute.xlu0 0
    %304 = vperm.xlu0 %303, %v301
    %v305 = vpop.permute.xlu0 %304
    %vm307 = vcmask 261120
    %v309 = vsel %vm307, %v300, 0
    %311 = vmatpush.msra.mxu0 0.0
    %312 = vmatpush.msra.mxu0 0.0
    %313 = vmatpush.msra.mxu0 0.0
    %314 = vmatpush.msra.mxu0 0.0
    %315 = vmatpush.msra.mxu0 0.0
    %316 = vmatpush.msra.mxu0 0.0
    %317 = vmatpush.msra.mxu0 0.0
    %318 = vmatpush.msra.mxu0 0.0
    %319 = vmatpush.msra.mxu0 0.0
    %320 = vmatpush.msra.mxu0 0.0
    %321 = vmatpush.msra.mxu0 0.0
    %322 = vmatpush.msra.mxu0 0.0
    %323 = vmatpush.msra.mxu0 %v298
    %324 = vmatpush.msra.mxu0 %v295
    %325 = vmatpush.msra.mxu0 %v292
    %326 = vmatpush.msra.mxu0 %v289
    %327 = vmatmul.f32.gmra.mxu0 %v309
    %v328 = vpop.f32.mrf.mxu0
    %v329 = vadd.f32 %v305, %v328
    %330 = vdwg.mxu0
    %v331 = vmax.f32 %v329, 0.0
    %v332 = vld [vmem:[%s7] sm:$0xff]
    %v333 = vld [vmem:[%s7 + $0x8] sm:$0xff]
    %v334 = vld [vmem:[%s7 + $0x10] sm:$0xff]
    %v335 = vld [vmem:[%s7 + $0x18] sm:$0xff]
    %v336 = vld [vmem:[%s8] sm:$0xff]
    %v337 = vld [vmem:[%s8 + $0x8] sm:$0xff]
    %v338 = vld [vmem:[%s8 + $0x10] sm:$0xff]
    %v339 = vld [vmem:[%s8 + $0x18] sm:$0xff]
    %341 = vset.pattern.permute.xlu0 0
    %342 = vperm.xlu0 %341, %v336
    %v343 = vpop.permute.xlu0 %342
    %346 = vset.pattern.permute.xlu0 0
    %347 = vperm.xlu0 %346, %v337
    %v348 = vpop.permute.xlu0 %347
    %351 = vset.pattern.permute.xlu0 0
    %352 = vperm.xlu0 %351, %v338
    %v353 = vpop.permute.xlu0 %352
    %356 = vset.pattern.permute.xlu0 0
    %357 = vperm.xlu0 %356, %v339
    %v358 = vpop.permute.xlu0 %357
    %vm360 = vcmask 15360
    %v362 = vsel %vm360, %v332, 0
    %v365 = vsel %vm360, %v333, 0
    %v368 = vsel %vm360, %v334, 0
    %v371 = vsel %vm360, %v335, 0
    %vm373 = vcmask 1041408
    %v375 = vsel %vm373, %v331, 0
    %377 = vmatpush.msra.mxu0 0.0
    %378 = vmatpush.msra.mxu0 0.0
    %379 = vmatpush.msra.mxu0 0.0
    %380 = vmatpush.msra.mxu0 0.0
    %381 = vmatpush.msra.mxu0 0.0
    %382 = vmatpush.msra.mxu0 0.0
    %383 = vmatpush.msra.mxu0 0.0
    %384 = vmatpush.msra.mxu0 0.0
    %385 = vmatpush.msra.mxu0 0.0
    %386 = vmatpush.msra.mxu0 0.0
    %387 = vmatpush.msra.mxu0 0.0
    %388 = vmatpush.msra.mxu0 0.0
    %389 = vmatpush.msra.mxu0 0.0
    %390 = vmatpush.msra.mxu0 0.0
    %391 = vmatpush.msra.mxu0 0.0
    %392 = vmatpush.msra.mxu0 %v375
    %393 = vmatmul.f32.gmra.mxu0 %v362
    %v394 = vpop.f32.mrf.mxu0
    %v395 = vadd.f32 %v343, %v394
    %396 = vmatmul.f32.gmra.mxu0 %v365
    %v397 = vpop.f32.mrf.mxu0
    %v398 = vadd.f32 %v348, %v397
    %399 = vmatmul.f32.gmra.mxu0 %v368
    %v400 = vpop.f32.mrf.mxu0
    %v401 = vadd.f32 %v353, %v400
    %402 = vmatmul.f32.gmra.mxu0 %v371
    %v403 = vpop.f32.mrf.mxu0
    %v404 = vadd.f32 %v358, %v403
    %405 = vdwg.mxu0
    %v406 = vxor.u32 %v395, 2147483648
    %v407 = vxor.u32 %v398, 2147483648
    %v408 = vxor.u32 %v401, 2147483648
    %v409 = vxor.u32 %v404, 2147483648
    %v410 = vmul.f32 %v406, 1.442695
    %v411 = vpow.pop %v410
    %v412 = vmul.f32 %v407, 1.442695
    %v413 = vpow.pop %v412
    %v414 = vmul.f32 %v408, 1.442695
    %v415 = vpow.pop %v414
    %v416 = vmul.f32 %v409, 1.442695
    %v417 = vpow.pop %v416
    %v418 = vadd.f32 %v411, 1.0
    %v419 = vadd.f32 %v413, 1.0
    %v420 = vadd.f32 %v415, 1.0
    %v421 = vadd.f32 %v417, 1.0
    %v422 = vrcp.pop %v418
    %v423 = vmul.f32 %v418, %v422
    %v424 = vsub.f32 1.0, %v423
    %v425 = vmul.f32 %v422, %v424
    %v426 = vadd.f32 %v422, %v425
    %vm427 = vweird.f32 %v418
    %vm428 = vweird.f32 %v422
    %vm429 = vmor %vm427, %vm428
    %v430 = vsel %vm429, %v422, %v426
    %v431 = vand.u32 2147483647, %v418
    %vm432 = vcmp.eq.f32.partialorder %v431, 8.507059e+37
    %v433 = vand.u32 %v418, 2147483648
    %v434 = vor.u32 1.1754944e-38, %v433
    %v435 = vsel %vm432, %v434, %v430
    %v436 = vmul.f32 1.0, %v435
    %v437 = vrcp.pop %v419
    %v438 = vmul.f32 %v419, %v437
    %v439 = vsub.f32 1.0, %v438
    %v440 = vmul.f32 %v437, %v439
    %v441 = vadd.f32 %v437, %v440
    %vm442 = vweird.f32 %v419
    %vm443 = vweird.f32 %v437
    %vm444 = vmor %vm442, %vm443
    %v445 = vsel %vm444, %v437, %v441
    %v446 = vand.u32 2147483647, %v419
    %vm447 = vcmp.eq.f32.partialorder %v446, 8.507059e+37
    %v448 = vand.u32 %v419, 2147483648
    %v449 = vor.u32 1.1754944e-38, %v448
    %v450 = vsel %vm447, %v449, %v445
    %v451 = vmul.f32 1.0, %v450
    %v452 = vrcp.pop %v420
    %v453 = vmul.f32 %v420, %v452
    %v454 = vsub.f32 1.0, %v453
    %v455 = vmul.f32 %v452, %v454
    %v456 = vadd.f32 %v452, %v455
    %vm457 = vweird.f32 %v420
    %vm458 = vweird.f32 %v452
    %vm459 = vmor %vm457, %vm458
    %v460 = vsel %vm459, %v452, %v456
    %v461 = vand.u32 2147483647, %v420
    %vm462 = vcmp.eq.f32.partialorder %v461, 8.507059e+37
    %v463 = vand.u32 %v420, 2147483648
    %v464 = vor.u32 1.1754944e-38, %v463
    %v465 = vsel %vm462, %v464, %v460
    %v466 = vmul.f32 1.0, %v465
    %v467 = vrcp.pop %v421
    %v468 = vmul.f32 %v421, %v467
    %v469 = vsub.f32 1.0, %v468
    %v470 = vmul.f32 %v467, %v469
    %v471 = vadd.f32 %v467, %v470
    %vm472 = vweird.f32 %v421
    %vm473 = vweird.f32 %v467
    %vm474 = vmor %vm472, %vm473
    %v475 = vsel %vm474, %v467, %v471
    %v476 = vand.u32 2147483647, %v421
    %vm477 = vcmp.eq.f32.partialorder %v476, 8.507059e+37
    %v478 = vand.u32 %v421, 2147483648
    %v479 = vor.u32 1.1754944e-38, %v478
    %v480 = vsel %vm477, %v479, %v475
    %v481 = vmul.f32 1.0, %v480
    %v483 = vsel %vm360, %v436, 0
    %v486 = vsel %vm360, %v451, 0
    %v489 = vsel %vm360, %v466, 0
    %v492 = vsel %vm360, %v481, 0
    %v495 = vsel %vm373, %v73, 0
    %497 = vmatpush.msra.mxu0 0.0
    %498 = vmatpush.msra.mxu0 0.0
    %499 = vmatpush.msra.mxu0 0.0
    %500 = vmatpush.msra.mxu0 0.0
    %501 = vmatpush.msra.mxu0 0.0
    %502 = vmatpush.msra.mxu0 0.0
    %503 = vmatpush.msra.mxu0 0.0
    %504 = vmatpush.msra.mxu0 0.0
    %505 = vmatpush.msra.mxu0 0.0
    %506 = vmatpush.msra.mxu0 0.0
    %507 = vmatpush.msra.mxu0 0.0
    %508 = vmatpush.msra.mxu0 0.0
    %509 = vmatpush.msra.mxu0 0.0
    %510 = vmatpush.msra.mxu0 0.0
    %511 = vmatpush.msra.mxu0 0.0
    %512 = vmatpush.msra.mxu0 %v495
    %513 = vmatmul.f32.gmra.mxu0 %v483
    %v514 = vpop.f32.mrf.mxu0
    %v515 = vadd.f32 0.0, %v514
    %516 = vmatmul.f32.gmra.mxu0 %v486
    %v517 = vpop.f32.mrf.mxu0
    %v518 = vadd.f32 0.0, %v517
    %519 = vmatmul.f32.gmra.mxu0 %v489
    %v520 = vpop.f32.mrf.mxu0
    %v521 = vadd.f32 0.0, %v520
    %522 = vmatmul.f32.gmra.mxu0 %v492
    %v523 = vpop.f32.mrf.mxu0
    %v524 = vadd.f32 0.0, %v523
    %525 = vdwg.mxu0
    %v526 = vmul.f32 %v260, %v515
    %v527 = vmul.f32 %v263, %v518
    %v528 = vmul.f32 %v266, %v521
    %v529 = vmul.f32 %v269, %v524
    %v530 = vadd.f32 %v51, %v526
    %v531 = vadd.f32 %v52, %v527
    %v532 = vadd.f32 %v53, %v528
    %v533 = vadd.f32 %v54, %v529
    %s534 = scalar_lea.vmem %s1, 32
    %v535 = vld [vmem:[%s534] sm:$0xff]
    %v536 = vld [vmem:[%s534 + $0x8] sm:$0xff]
    %v537 = vld [vmem:[%s534 + $0x10] sm:$0xff]
    %v538 = vld [vmem:[%s534 + $0x18] sm:$0xff]
    %s539 = scalar_lea.vmem %s2, 32
    %v540 = vld [vmem:[%s539] sm:$0xff]
    %v541 = vld [vmem:[%s539 + $0x8] sm:$0xff]
    %v542 = vld [vmem:[%s539 + $0x10] sm:$0xff]
    %v543 = vld [vmem:[%s539 + $0x18] sm:$0xff]
    %544 = vrot.lane.b32.xlu0 %v530, 1
    %v545 = vpop.permute.xlu0 %544
    %546 = vrot.lane.b32.xlu0 %v531, 1
    %v547 = vpop.permute.xlu0 %546
    %548 = vrot.lane.b32.xlu0 %v532, 1
    %v549 = vpop.permute.xlu0 %548
    %550 = vrot.lane.b32.xlu0 %v533, 1
    %v551 = vpop.permute.xlu0 %550
    %v552 = vmul.f32 %v545, %v91
    %v553 = vmul.f32 %v547, %v91
    %v554 = vmul.f32 %v549, %v91
    %v555 = vmul.f32 %v551, %v91
    %556 = vrot.lane.b32.xlu0 %v530, 127
    %v557 = vpop.permute.xlu0 %556
    %558 = vrot.lane.b32.xlu0 %v531, 127
    %v559 = vpop.permute.xlu0 %558
    %560 = vrot.lane.b32.xlu0 %v532, 127
    %v561 = vpop.permute.xlu0 %560
    %562 = vrot.lane.b32.xlu0 %v533, 127
    %v563 = vpop.permute.xlu0 %562
    %v564 = vmul.f32 %v557, %v106
    %v565 = vmul.f32 %v559, %v106
    %v566 = vmul.f32 %v561, %v106
    %v567 = vmul.f32 %v563, %v106
    %569 = vset.pattern.permute.xlu0 0
    %570 = vperm.xlu0 %569, %v540
    %v571 = vpop.permute.xlu0 %570
    %574 = vset.pattern.permute.xlu0 0
    %575 = vperm.xlu0 %574, %v541
    %v576 = vpop.permute.xlu0 %575
    %579 = vset.pattern.permute.xlu0 0
    %580 = vperm.xlu0 %579, %v542
    %v581 = vpop.permute.xlu0 %580
    %584 = vset.pattern.permute.xlu0 0
    %585 = vperm.xlu0 %584, %v543
    %v586 = vpop.permute.xlu0 %585
    %v589 = vsel %vm132, %v535, 0
    %v592 = vsel %vm132, %v536, 0
    %v595 = vsel %vm132, %v537, 0
    %v598 = vsel %vm132, %v538, 0
    %600 = vmatpush.msra.mxu0 0.0
    %601 = vmatpush.msra.mxu0 0.0
    %602 = vmatpush.msra.mxu0 0.0
    %603 = vmatpush.msra.mxu0 0.0
    %604 = vmatpush.msra.mxu0 %v567
    %605 = vmatpush.msra.mxu0 %v566
    %606 = vmatpush.msra.mxu0 %v565
    %607 = vmatpush.msra.mxu0 %v564
    %608 = vmatpush.msra.mxu0 %v533
    %609 = vmatpush.msra.mxu0 %v532
    %610 = vmatpush.msra.mxu0 %v531
    %611 = vmatpush.msra.mxu0 %v530
    %612 = vmatpush.msra.mxu0 %v555
    %613 = vmatpush.msra.mxu0 %v554
    %614 = vmatpush.msra.mxu0 %v553
    %615 = vmatpush.msra.mxu0 %v552
    %616 = vmatmul.f32.gmra.mxu0 %v589
    %v617 = vpop.f32.mrf.mxu0
    %v618 = vadd.f32 %v571, %v617
    %619 = vmatmul.f32.gmra.mxu0 %v592
    %v620 = vpop.f32.mrf.mxu0
    %v621 = vadd.f32 %v576, %v620
    %622 = vmatmul.f32.gmra.mxu0 %v595
    %v623 = vpop.f32.mrf.mxu0
    %v624 = vadd.f32 %v581, %v623
    %625 = vmatmul.f32.gmra.mxu0 %v598
    %v626 = vpop.f32.mrf.mxu0
    %v627 = vadd.f32 %v586, %v626
    %628 = vdwg.mxu0
    %v629 = vmax.f32 %v618, 0.0
    %v630 = vmax.f32 %v621, 0.0
    %v631 = vmax.f32 %v624, 0.0
    %v632 = vmax.f32 %v627, 0.0
    %s633 = scalar_lea.vmem %s3, 32
    %v634 = vld [vmem:[%s633] sm:$0xff]
    %v635 = vld [vmem:[%s633 + $0x8] sm:$0xff]
    %v636 = vld [vmem:[%s633 + $0x10] sm:$0xff]
    %v637 = vld [vmem:[%s633 + $0x18] sm:$0xff]
    %s638 = scalar_lea.vmem %s4, 32
    %v639 = vld [vmem:[%s638] sm:$0xff]
    %v640 = vld [vmem:[%s638 + $0x8] sm:$0xff]
    %v641 = vld [vmem:[%s638 + $0x10] sm:$0xff]
    %v642 = vld [vmem:[%s638 + $0x18] sm:$0xff]
    %643 = vrot.lane.b32.xlu0 %v629, 1
    %v644 = vpop.permute.xlu0 %643
    %645 = vrot.lane.b32.xlu0 %v630, 1
    %v646 = vpop.permute.xlu0 %645
    %647 = vrot.lane.b32.xlu0 %v631, 1
    %v648 = vpop.permute.xlu0 %647
    %649 = vrot.lane.b32.xlu0 %v632, 1
    %v650 = vpop.permute.xlu0 %649
    %v651 = vmul.f32 %v644, %v91
    %v652 = vmul.f32 %v646, %v91
    %v653 = vmul.f32 %v648, %v91
    %v654 = vmul.f32 %v650, %v91
    %655 = vrot.lane.b32.xlu0 %v629, 127
    %v656 = vpop.permute.xlu0 %655
    %657 = vrot.lane.b32.xlu0 %v630, 127
    %v658 = vpop.permute.xlu0 %657
    %659 = vrot.lane.b32.xlu0 %v631, 127
    %v660 = vpop.permute.xlu0 %659
    %661 = vrot.lane.b32.xlu0 %v632, 127
    %v662 = vpop.permute.xlu0 %661
    %v663 = vmul.f32 %v656, %v106
    %v664 = vmul.f32 %v658, %v106
    %v665 = vmul.f32 %v660, %v106
    %v666 = vmul.f32 %v662, %v106
    %668 = vset.pattern.permute.xlu0 0
    %669 = vperm.xlu0 %668, %v639
    %v670 = vpop.permute.xlu0 %669
    %673 = vset.pattern.permute.xlu0 0
    %674 = vperm.xlu0 %673, %v640
    %v675 = vpop.permute.xlu0 %674
    %678 = vset.pattern.permute.xlu0 0
    %679 = vperm.xlu0 %678, %v641
    %v680 = vpop.permute.xlu0 %679
    %683 = vset.pattern.permute.xlu0 0
    %684 = vperm.xlu0 %683, %v642
    %v685 = vpop.permute.xlu0 %684
    %v688 = vsel %vm132, %v634, 0
    %v691 = vsel %vm132, %v635, 0
    %v694 = vsel %vm132, %v636, 0
    %v697 = vsel %vm132, %v637, 0
    %699 = vmatpush.msra.mxu0 0.0
    %700 = vmatpush.msra.mxu0 0.0
    %701 = vmatpush.msra.mxu0 0.0
    %702 = vmatpush.msra.mxu0 0.0
    %703 = vmatpush.msra.mxu0 %v666
    %704 = vmatpush.msra.mxu0 %v665
    %705 = vmatpush.msra.mxu0 %v664
    %706 = vmatpush.msra.mxu0 %v663
    %707 = vmatpush.msra.mxu0 %v632
    %708 = vmatpush.msra.mxu0 %v631
    %709 = vmatpush.msra.mxu0 %v630
    %710 = vmatpush.msra.mxu0 %v629
    %711 = vmatpush.msra.mxu0 %v654
    %712 = vmatpush.msra.mxu0 %v653
    %713 = vmatpush.msra.mxu0 %v652
    %714 = vmatpush.msra.mxu0 %v651
    %715 = vmatmul.f32.gmra.mxu0 %v688
    %v716 = vpop.f32.mrf.mxu0
    %v717 = vadd.f32 %v670, %v716
    %718 = vmatmul.f32.gmra.mxu0 %v691
    %v719 = vpop.f32.mrf.mxu0
    %v720 = vadd.f32 %v675, %v719
    %721 = vmatmul.f32.gmra.mxu0 %v694
    %v722 = vpop.f32.mrf.mxu0
    %v723 = vadd.f32 %v680, %v722
    %724 = vmatmul.f32.gmra.mxu0 %v697
    %v725 = vpop.f32.mrf.mxu0
    %v726 = vadd.f32 %v685, %v725
    %727 = vdwg.mxu0
    %728 = vmatpush.msra.mxu0 %v72
    %729 = vmatpush.msra.mxu0 %v71
    %730 = vmatpush.msra.mxu0 %v70
    %731 = vmatpush.msra.mxu0 %v69
    %732 = vmatpush.msra.mxu0 %v68
    %733 = vmatpush.msra.mxu0 %v67
    %734 = vmatpush.msra.mxu0 %v66
    %735 = vmatpush.msra.mxu0 %v65
    %736 = vmatpush.msra.mxu0 %v64
    %737 = vmatpush.msra.mxu0 %v63
    %738 = vmatpush.msra.mxu0 %v62
    %739 = vmatpush.msra.mxu0 %v61
    %740 = vmatpush.msra.mxu0 %v60
    %741 = vmatpush.msra.mxu0 %v59
    %742 = vmatpush.msra.mxu0 %v58
    %743 = vmatpush.msra.mxu0 %v57
    %744 = vmatmul.f32.gmra.mxu0 %v717
    %v745 = vpop.f32.mrf.mxu0
    %v746 = vadd.f32 0.0, %v745
    %747 = vmatmul.f32.gmra.mxu0 %v720
    %v748 = vpop.f32.mrf.mxu0
    %v749 = vadd.f32 0.0, %v748
    %750 = vmatmul.f32.gmra.mxu0 %v723
    %v751 = vpop.f32.mrf.mxu0
    %v752 = vadd.f32 0.0, %v751
    %753 = vmatmul.f32.gmra.mxu0 %v726
    %v754 = vpop.f32.mrf.mxu0
    %v755 = vadd.f32 0.0, %v754
    %756 = vdwg.mxu0
    %s757 = scalar_lea.vmem %s5, 2
    %v758 = vld [vmem:[%s757] sm:$0x3]
    %s759 = scalar_lea.vmem %s6, 2
    %v760 = vld [vmem:[%s759] sm:$0x3]
    %762 = vset.pattern.permute.xlu0 0
    %763 = vperm.xlu0 %762, %v760
    %v764 = vpop.permute.xlu0 %763
    %v767 = vsel %vm307, %v758, 0
    %769 = vmatpush.msra.mxu0 0.0
    %770 = vmatpush.msra.mxu0 0.0
    %771 = vmatpush.msra.mxu0 0.0
    %772 = vmatpush.msra.mxu0 0.0
    %773 = vmatpush.msra.mxu0 0.0
    %774 = vmatpush.msra.mxu0 0.0
    %775 = vmatpush.msra.mxu0 0.0
    %776 = vmatpush.msra.mxu0 0.0
    %777 = vmatpush.msra.mxu0 0.0
    %778 = vmatpush.msra.mxu0 0.0
    %779 = vmatpush.msra.mxu0 0.0
    %780 = vmatpush.msra.mxu0 0.0
    %781 = vmatpush.msra.mxu0 %v755
    %782 = vmatpush.msra.mxu0 %v752
    %783 = vmatpush.msra.mxu0 %v749
    %784 = vmatpush.msra.mxu0 %v746
    %785 = vmatmul.f32.gmra.mxu0 %v767
    %v786 = vpop.f32.mrf.mxu0
    %v787 = vadd.f32 %v764, %v786
    %788 = vdwg.mxu0
    %v789 = vmax.f32 %v787, 0.0
    %s790 = scalar_lea.vmem %s7, 32
    %v791 = vld [vmem:[%s790] sm:$0xff]
    %v792 = vld [vmem:[%s790 + $0x8] sm:$0xff]
    %v793 = vld [vmem:[%s790 + $0x10] sm:$0xff]
    %v794 = vld [vmem:[%s790 + $0x18] sm:$0xff]
    %s795 = scalar_lea.vmem %s8, 32
    %v796 = vld [vmem:[%s795] sm:$0xff]
    %v797 = vld [vmem:[%s795 + $0x8] sm:$0xff]
    %v798 = vld [vmem:[%s795 + $0x10] sm:$0xff]
    %v799 = vld [vmem:[%s795 + $0x18] sm:$0xff]
    %801 = vset.pattern.permute.xlu0 0
    %802 = vperm.xlu0 %801, %v796
    %v803 = vpop.permute.xlu0 %802
    %806 = vset.pattern.permute.xlu0 0
    %807 = vperm.xlu0 %806, %v797
    %v808 = vpop.permute.xlu0 %807
    %811 = vset.pattern.permute.xlu0 0
    %812 = vperm.xlu0 %811, %v798
    %v813 = vpop.permute.xlu0 %812
    %816 = vset.pattern.permute.xlu0 0
    %817 = vperm.xlu0 %816, %v799
    %v818 = vpop.permute.xlu0 %817
    %v821 = vsel %vm360, %v791, 0
    %v824 = vsel %vm360, %v792, 0
    %v827 = vsel %vm360, %v793, 0
    %v830 = vsel %vm360, %v794, 0
    %v833 = vsel %vm373, %v789, 0
    %835 = vmatpush.msra.mxu0 0.0
    %836 = vmatpush.msra.mxu0 0.0
    %837 = vmatpush.msra.mxu0 0.0
    %838 = vmatpush.msra.mxu0 0.0
    %839 = vmatpush.msra.mxu0 0.0
    %840 = vmatpush.msra.mxu0 0.0
    %841 = vmatpush.msra.mxu0 0.0
    %842 = vmatpush.msra.mxu0 0.0
    %843 = vmatpush.msra.mxu0 0.0
    %844 = vmatpush.msra.mxu0 0.0
    %845 = vmatpush.msra.mxu0 0.0
    %846 = vmatpush.msra.mxu0 0.0
    %847 = vmatpush.msra.mxu0 0.0
    %848 = vmatpush.msra.mxu0 0.0
    %849 = vmatpush.msra.mxu0 0.0
    %850 = vmatpush.msra.mxu0 %v833
    %851 = vmatmul.f32.gmra.mxu0 %v821
    %v852 = vpop.f32.mrf.mxu0
    %v853 = vadd.f32 %v803, %v852
    %854 = vmatmul.f32.gmra.mxu0 %v824
    %v855 = vpop.f32.mrf.mxu0
    %v856 = vadd.f32 %v808, %v855
    %857 = vmatmul.f32.gmra.mxu0 %v827
    %v858 = vpop.f32.mrf.mxu0
    %v859 = vadd.f32 %v813, %v858
    %860 = vmatmul.f32.gmra.mxu0 %v830
    %v861 = vpop.f32.mrf.mxu0
    %v862 = vadd.f32 %v818, %v861
    %863 = vdwg.mxu0
    %v864 = vxor.u32 %v853, 2147483648
    %v865 = vxor.u32 %v856, 2147483648
    %v866 = vxor.u32 %v859, 2147483648
    %v867 = vxor.u32 %v862, 2147483648
    %v868 = vmul.f32 %v864, 1.442695
    %v869 = vpow.pop %v868
    %v870 = vmul.f32 %v865, 1.442695
    %v871 = vpow.pop %v870
    %v872 = vmul.f32 %v866, 1.442695
    %v873 = vpow.pop %v872
    %v874 = vmul.f32 %v867, 1.442695
    %v875 = vpow.pop %v874
    %v876 = vadd.f32 %v869, 1.0
    %v877 = vadd.f32 %v871, 1.0
    %v878 = vadd.f32 %v873, 1.0
    %v879 = vadd.f32 %v875, 1.0
    %v880 = vrcp.pop %v876
    %v881 = vmul.f32 %v876, %v880
    %v882 = vsub.f32 1.0, %v881
    %v883 = vmul.f32 %v880, %v882
    %v884 = vadd.f32 %v880, %v883
    %vm885 = vweird.f32 %v876
    %vm886 = vweird.f32 %v880
    %vm887 = vmor %vm885, %vm886
    %v888 = vsel %vm887, %v880, %v884
    %v889 = vand.u32 2147483647, %v876
    %vm890 = vcmp.eq.f32.partialorder %v889, 8.507059e+37
    %v891 = vand.u32 %v876, 2147483648
    %v892 = vor.u32 1.1754944e-38, %v891
    %v893 = vsel %vm890, %v892, %v888
    %v894 = vmul.f32 1.0, %v893
    %v895 = vrcp.pop %v877
    %v896 = vmul.f32 %v877, %v895
    %v897 = vsub.f32 1.0, %v896
    %v898 = vmul.f32 %v895, %v897
    %v899 = vadd.f32 %v895, %v898
    %vm900 = vweird.f32 %v877
    %vm901 = vweird.f32 %v895
    %vm902 = vmor %vm900, %vm901
    %v903 = vsel %vm902, %v895, %v899
    %v904 = vand.u32 2147483647, %v877
    %vm905 = vcmp.eq.f32.partialorder %v904, 8.507059e+37
    %v906 = vand.u32 %v877, 2147483648
    %v907 = vor.u32 1.1754944e-38, %v906
    %v908 = vsel %vm905, %v907, %v903
    %v909 = vmul.f32 1.0, %v908
    %v910 = vrcp.pop %v878
    %v911 = vmul.f32 %v878, %v910
    %v912 = vsub.f32 1.0, %v911
    %v913 = vmul.f32 %v910, %v912
    %v914 = vadd.f32 %v910, %v913
    %vm915 = vweird.f32 %v878
    %vm916 = vweird.f32 %v910
    %vm917 = vmor %vm915, %vm916
    %v918 = vsel %vm917, %v910, %v914
    %v919 = vand.u32 2147483647, %v878
    %vm920 = vcmp.eq.f32.partialorder %v919, 8.507059e+37
    %v921 = vand.u32 %v878, 2147483648
    %v922 = vor.u32 1.1754944e-38, %v921
    %v923 = vsel %vm920, %v922, %v918
    %v924 = vmul.f32 1.0, %v923
    %v925 = vrcp.pop %v879
    %v926 = vmul.f32 %v879, %v925
    %v927 = vsub.f32 1.0, %v926
    %v928 = vmul.f32 %v925, %v927
    %v929 = vadd.f32 %v925, %v928
    %vm930 = vweird.f32 %v879
    %vm931 = vweird.f32 %v925
    %vm932 = vmor %vm930, %vm931
    %v933 = vsel %vm932, %v925, %v929
    %v934 = vand.u32 2147483647, %v879
    %vm935 = vcmp.eq.f32.partialorder %v934, 8.507059e+37
    %v936 = vand.u32 %v879, 2147483648
    %v937 = vor.u32 1.1754944e-38, %v936
    %v938 = vsel %vm935, %v937, %v933
    %v939 = vmul.f32 1.0, %v938
    %v941 = vsel %vm360, %v894, 0
    %v944 = vsel %vm360, %v909, 0
    %v947 = vsel %vm360, %v924, 0
    %v950 = vsel %vm360, %v939, 0
    %952 = vmatpush.msra.mxu0 0.0
    %953 = vmatpush.msra.mxu0 0.0
    %954 = vmatpush.msra.mxu0 0.0
    %955 = vmatpush.msra.mxu0 0.0
    %956 = vmatpush.msra.mxu0 0.0
    %957 = vmatpush.msra.mxu0 0.0
    %958 = vmatpush.msra.mxu0 0.0
    %959 = vmatpush.msra.mxu0 0.0
    %960 = vmatpush.msra.mxu0 0.0
    %961 = vmatpush.msra.mxu0 0.0
    %962 = vmatpush.msra.mxu0 0.0
    %963 = vmatpush.msra.mxu0 0.0
    %964 = vmatpush.msra.mxu0 0.0
    %965 = vmatpush.msra.mxu0 0.0
    %966 = vmatpush.msra.mxu0 0.0
    %967 = vmatpush.msra.mxu0 %v495
    %968 = vmatmul.f32.gmra.mxu0 %v941
    %v969 = vpop.f32.mrf.mxu0
    %v970 = vadd.f32 0.0, %v969
    %971 = vmatmul.f32.gmra.mxu0 %v944
    %v972 = vpop.f32.mrf.mxu0
    %v973 = vadd.f32 0.0, %v972
    %974 = vmatmul.f32.gmra.mxu0 %v947
    %v975 = vpop.f32.mrf.mxu0
    %v976 = vadd.f32 0.0, %v975
    %977 = vmatmul.f32.gmra.mxu0 %v950
    %v978 = vpop.f32.mrf.mxu0
    %v979 = vadd.f32 0.0, %v978
    %980 = vdwg.mxu0
    %v981 = vmul.f32 %v717, %v970
    %v982 = vmul.f32 %v720, %v973
    %v983 = vmul.f32 %v723, %v976
    %v984 = vmul.f32 %v726, %v979
    %v985 = vadd.f32 %v530, %v981
    %v986 = vadd.f32 %v531, %v982
    %v987 = vadd.f32 %v532, %v983
    %v988 = vadd.f32 %v533, %v984
    %v989 = vld [vmem:[%s9] sm:$0xff]
    %v990 = vld [vmem:[%s9 + $0x8] sm:$0xff]
    %v991 = vld [vmem:[%s9 + $0x10] sm:$0xff]
    %v992 = vld [vmem:[%s9 + $0x18] sm:$0xff]
    %v993 = vld [vmem:[%s10] sm:$0xff]
    %v994 = vld [vmem:[%s10 + $0x8] sm:$0xff]
    %v995 = vld [vmem:[%s10 + $0x10] sm:$0xff]
    %v996 = vld [vmem:[%s10 + $0x18] sm:$0xff]
    %997 = vrot.lane.b32.xlu0 %v985, 1
    %v998 = vpop.permute.xlu0 %997
    %999 = vrot.lane.b32.xlu0 %v986, 1
    %v1000 = vpop.permute.xlu0 %999
    %1001 = vrot.lane.b32.xlu0 %v987, 1
    %v1002 = vpop.permute.xlu0 %1001
    %1003 = vrot.lane.b32.xlu0 %v988, 1
    %v1004 = vpop.permute.xlu0 %1003
    %v1005 = vmul.f32 %v998, %v91
    %v1006 = vmul.f32 %v1000, %v91
    %v1007 = vmul.f32 %v1002, %v91
    %v1008 = vmul.f32 %v1004, %v91
    %1009 = vrot.lane.b32.xlu0 %v985, 127
    %v1010 = vpop.permute.xlu0 %1009
    %1011 = vrot.lane.b32.xlu0 %v986, 127
    %v1012 = vpop.permute.xlu0 %1011
    %1013 = vrot.lane.b32.xlu0 %v987, 127
    %v1014 = vpop.permute.xlu0 %1013
    %1015 = vrot.lane.b32.xlu0 %v988, 127
    %v1016 = vpop.permute.xlu0 %1015
    %v1017 = vmul.f32 %v1010, %v106
    %v1018 = vmul.f32 %v1012, %v106
    %v1019 = vmul.f32 %v1014, %v106
    %v1020 = vmul.f32 %v1016, %v106
    %1022 = vset.pattern.permute.xlu0 0
    %1023 = vperm.xlu0 %1022, %v993
    %v1024 = vpop.permute.xlu0 %1023
    %1027 = vset.pattern.permute.xlu0 0
    %1028 = vperm.xlu0 %1027, %v994
    %v1029 = vpop.permute.xlu0 %1028
    %1032 = vset.pattern.permute.xlu0 0
    %1033 = vperm.xlu0 %1032, %v995
    %v1034 = vpop.permute.xlu0 %1033
    %1037 = vset.pattern.permute.xlu0 0
    %1038 = vperm.xlu0 %1037, %v996
    %v1039 = vpop.permute.xlu0 %1038
    %v1042 = vsel %vm132, %v989, 0
    %v1045 = vsel %vm132, %v990, 0
    %v1048 = vsel %vm132, %v991, 0
    %v1051 = vsel %vm132, %v992, 0
    %1053 = vmatpush.msra.mxu0 0.0
    %1054 = vmatpush.msra.mxu0 0.0
    %1055 = vmatpush.msra.mxu0 0.0
    %1056 = vmatpush.msra.mxu0 0.0
    %1057 = vmatpush.msra.mxu0 %v1020
    %1058 = vmatpush.msra.mxu0 %v1019
    %1059 = vmatpush.msra.mxu0 %v1018
    %1060 = vmatpush.msra.mxu0 %v1017
    %1061 = vmatpush.msra.mxu0 %v988
    %1062 = vmatpush.msra.mxu0 %v987
    %1063 = vmatpush.msra.mxu0 %v986
    %1064 = vmatpush.msra.mxu0 %v985
    %1065 = vmatpush.msra.mxu0 %v1008
    %1066 = vmatpush.msra.mxu0 %v1007
    %1067 = vmatpush.msra.mxu0 %v1006
    %1068 = vmatpush.msra.mxu0 %v1005
    %1069 = vmatmul.f32.gmra.mxu0 %v1042
    %v1070 = vpop.f32.mrf.mxu0
    %v1071 = vadd.f32 %v1024, %v1070
    %1072 = vmatmul.f32.gmra.mxu0 %v1045
    %v1073 = vpop.f32.mrf.mxu0
    %v1074 = vadd.f32 %v1029, %v1073
    %1075 = vmatmul.f32.gmra.mxu0 %v1048
    %v1076 = vpop.f32.mrf.mxu0
    %v1077 = vadd.f32 %v1034, %v1076
    %1078 = vmatmul.f32.gmra.mxu0 %v1051
    %v1079 = vpop.f32.mrf.mxu0
    %v1080 = vadd.f32 %v1039, %v1079
    %1081 = vdwg.mxu0
    %v1082 = vadd.f32 %v1071, %v51
    %v1083 = vadd.f32 %v1074, %v52
    %v1084 = vadd.f32 %v1077, %v53
    %v1085 = vadd.f32 %v1080, %v54
    %1086 = vst [vmem:[#allocation2] sm:$0xff] %v1082
    %1087 = vst [vmem:[#allocation2 + $0x8] sm:$0xff] %v1083
    %1088 = vst [vmem:[#allocation2 + $0x10] sm:$0xff] %v1084
    %1089 = vst [vmem:[#allocation2 + $0x18] sm:$0xff] %v1085
    // Predicated region
    $region62: #{tpu_custom_call.1} parent=1 // pred_check
      _
    $region63: #{tpu_custom_call.1} parent=1 // pred_check_branch
      %1091 = sbr.rel (0) target = $region65
    $region64: #{tpu_custom_call.1} parent=1 // pred_region
      %1093 = vsyncadd [#allocation3], 0
      %s1094 = sshll.u32 [#allocation2], 4
      %s1095 = int_to_ptr.vmem [resolvable:$true] %s1094
      %s1096 = sshll.u32 %s15, 4
      %s1097 = int_to_ptr.hbm [resolvable:$true] %s1096
      %1102 = dma.vmem_to_hbm [thread:$0]  %s1095, 512, %s1097, [#allocation3], 128, 128, 8
    $region65: #{tpu_custom_call.1} parent=1 // pred_fallthru
      _
    // Predicated region
    $region66: #{tpu_custom_call.1} parent=1 // pred_check
      _
    $region67: #{tpu_custom_call.1} parent=1 // pred_check_branch
      %1104 = sbr.rel (0) target = $region69
    $region68: #{tpu_custom_call.1} parent=1 // pred_region
      %1106 = dma.done [#allocation3], 512
    $region69: #{tpu_custom_call.1} parent=1 // pred_fallthru
      _
    %1107 = vsyncpa [#allocation3], 1

</llo_original>
